<compile_context>
chip_gen: v5e
topology: v5e:2x2
jax: 0.10.0
libtpu: 0.0.40
codegen_flags: <defaults>
</compile_context>

<pallas_src>
import functools

import jax
import jax.numpy as jnp
from jax.experimental import pallas as pl
from jax.experimental.pallas import tpu as pltpu

_INV_SQRT2 = 0.7071067811865476


def _erf_f32(x):
    # Abramowitz & Stegun 7.1.26 (max abs err ~1.5e-7), elementwise ops only.
    p = 0.3275911
    a1, a2, a3, a4, a5 = (0.254829592, -0.284496736, 1.421413741,
                          -1.453152027, 1.061405429)
    ax = jnp.abs(x)
    den = 1.0 + p * ax
    r = pl.reciprocal(den, approx=True)          # EUP slot (cheap)
    t = r * (2.0 - den * r)                      # one Newton step -> ~f32 exact
    poly = ((((a5 * t + a4) * t + a3) * t + a2) * t + a1) * t
    y = 1.0 - poly * jnp.exp(-ax * ax)
    return jnp.where(x >= 0.0, y, -y)


def _gelu(x):
    # torch.nn.functional.gelu(approximate='none') == x * Phi(x)
    return 0.5 * x * (1.0 + _erf_f32(x * _INV_SQRT2))


def _ccd_kernel(x_ref, halo_ref, w1_ref, w2_ref, s1_ref, t1_ref, s2_ref,
                t2_ref, o_ref, hbuf, *, seq_len, tile_l, dil, ksize):
    # x_ref:    (1, Cin, TL)            main L-tile, channels-on-sublanes
    # halo_ref: (1, 1, Cin, 2*halo)     [left halo | right halo] columns
    # w1_ref:   (ksize, Cmid, Cin)      conv1 weight, tap-major
    # w2_ref:   (Cout, Cmid)            1x1 conv2 weight
    # s*/t*:    (C, 1)                  folded BatchNorm (+ conv bias)
    # hbuf:     (Cin, TL + 2*halo)      VMEM scratch for the halo'd GELU window
    j = pl.program_id(1)
    halo = dil * (ksize - 1) // 2

    # Main tile; zero lanes past the true sequence end (== PyTorch zero pad,
    # also makes a partial last tile safe).
    x = x_ref[0].astype(jnp.float32)                                  # (Cin, TL)
    col = j * tile_l + jax.lax.broadcasted_iota(jnp.int32, x.shape, 1)
    x = jnp.where(col < seq_len, x, 0.0)

    # Assemble the GELU'd window: [left halo | tile | right halo].
    hbuf[:, halo:halo + tile_l] = _gelu(x)
    g_h = _gelu(halo_ref[0, 0].astype(jnp.float32))                   # (Cin, 2*halo)
    hbuf[:, 0:halo] = g_h[:, 0:halo]
    hbuf[:, halo + tile_l:halo + tile_l + halo] = g_h[:, halo:2 * halo]

    # Conv1 (k taps, dilation dil) as MXU matmuls; free dim = L-tile (lanes).
    cmid = w1_ref.shape[1]
    acc = jnp.zeros((cmid, tile_l), jnp.float32)
    for k in range(ksize):
        acc = acc + jnp.dot(w1_ref[k], hbuf[:, k * dil:k * dil + tile_l],
                            preferred_element_type=jnp.float32)
    y1 = acc * s1_ref[...] + t1_ref[...]          # conv1 bias + BN1 (folded)

    h2 = _gelu(y1)                                # (Cmid, TL)
    y2 = jnp.dot(w2_ref[...], h2, preferred_element_type=jnp.float32)
    # Dropout1d is identity at inference.
    o_ref[0] = (y2 * s2_ref[...] + t2_ref[...]).astype(o_ref.dtype)


def conv_conv_drop_block(x, params, *, dilation=1, eps=1e-5, tile_l=4096):
    """x: (N, 72, L) float32, PyTorch NCL layout. Returns (N, 72, L)."""
    N, Cin, L = x.shape
    w1, b1 = params["w1"], params["b1"]           # (32, 72, 3), (32,)
    w2, b2 = params["w2"], params["b2"]           # (72, 32, 1), (72,)
    Cmid, ksize = w1.shape[0], w1.shape[2]
    Cout = w2.shape[0]
    halo = dilation * (ksize - 1) // 2            # ConvBlock1: padding == dilation

    # Fold conv bias + eval-mode BatchNorm into per-channel scale / shift.
    s1 = params["g1"] / jnp.sqrt(params["v1"] + eps)
    t1 = (b1 - params["m1"]) * s1 + params["be1"]
    s2 = params["g2"] / jnp.sqrt(params["v2"] + eps)
    t2 = (b2 - params["m2"]) * s2 + params["be2"]

    # L tiling: TL is a multiple of 128 when tiling kicks in, else the full L.
    if L <= tile_l:
        tl, n_l = L, 1
    else:
        tl, n_l = tile_l, pl.cdiv(L, tile_l)
    l_pad = n_l * tl

    # Tiny per-tile halo array (N, n_l, Cin, 2*halo): the columns just outside
    # each tile, zero where outside [0, L).  Only wrapper-side data movement.
    def edge(lo, hi):
        lo_c, hi_c = max(lo, 0), min(hi, L)
        if hi_c <= lo_c:
            return jnp.zeros((N, Cin, hi - lo), x.dtype)
        piece = x[:, :, lo_c:hi_c]
        return jnp.pad(piece, ((0, 0), (0, 0), (lo_c - lo, hi - hi_c)))

    halos = jnp.stack(
        [jnp.concatenate([edge(j * tl - halo, j * tl),
                          edge((j + 1) * tl, (j + 1) * tl + halo)], axis=2)
         for j in range(n_l)], axis=1)            # (N, n_l, Cin, 2*halo)

    w1m = jnp.transpose(w1, (2, 0, 1))            # (ksize, Cmid, Cin)
    w2m = w2[:, :, 0]                             # (Cout, Cmid)

    kernel = functools.partial(_ccd_kernel, seq_len=L, tile_l=tl,
                               dil=dilation, ksize=ksize)
    out = pl.pallas_call(
        kernel,
        out_shape=jax.ShapeDtypeStruct((N, Cout, l_pad), x.dtype),
        grid=(N, n_l),
        in_specs=[
            pl.BlockSpec((1, Cin, tl), lambda b, j: (b, 0, j)),
            pl.BlockSpec((1, 1, Cin, 2 * halo), lambda b, j: (b, j, 0, 0)),
            pl.BlockSpec((ksize, Cmid, Cin), lambda b, j: (0, 0, 0)),
            pl.BlockSpec((Cout, Cmid), lambda b, j: (0, 0)),
            pl.BlockSpec((Cmid, 1), lambda b, j: (0, 0)),
            pl.BlockSpec((Cmid, 1), lambda b, j: (0, 0)),
            pl.BlockSpec((Cout, 1), lambda b, j: (0, 0)),
            pl.BlockSpec((Cout, 1), lambda b, j: (0, 0)),
        ],
        out_specs=pl.BlockSpec((1, Cout, tl), lambda b, j: (b, 0, j)),
        scratch_shapes=[pltpu.VMEM((Cin, tl + 2 * halo), jnp.float32)],
        compiler_params=pltpu.CompilerParams(
            dimension_semantics=("parallel", "parallel"),
            vmem_limit_bytes=32 * 1024 * 1024),
    )(x, halos, w1m, w2m, s1.reshape(-1, 1), t1.reshape(-1, 1),
      s2.reshape(-1, 1), t2.reshape(-1, 1))

    # TODO(synk): training-mode BatchNorm (batch statistics) and train-mode
    # Dropout1d (whole-channel dropout with 1/(1-p) rescale) are not
    # implemented; this reproduces the module's eval() forward.
    if l_pad != L:
        out = out[:, :, :L]
    return out


def _reference(x, params, *, dilation=1, eps=1e-5):
    """Pure-JAX / XLA reference with exact erf-GELU, for numerical validation."""
    def gelu(v):
        return 0.5 * v * (1.0 + jax.lax.erf(v * _INV_SQRT2))

    def conv1d(h, w, b, pad, dil):
        y = jax.lax.conv_general_dilated(
            h, w, window_strides=(1,), padding=[(pad, pad)],
            rhs_dilation=(dil,), dimension_numbers=("NCH", "OIH", "NCH"))
        return y + b[None, :, None]

    def bn(h, g, be, m, v):
        return (h - m[None, :, None]) / jnp.sqrt(v[None, :, None] + eps) * \
            g[None, :, None] + be[None, :, None]

    h = gelu(x)
    h = conv1d(h, params["w1"], params["b1"], dilation, dilation)
    h = bn(h, params["g1"], params["be1"], params["m1"], params["v1"])
    h = gelu(h)
    h = conv1d(h, params["w2"], params["b2"], 0, 1)
    h = bn(h, params["g2"], params["be2"], params["m2"], params["v2"])
    return h


if __name__ == "__main__":
    key = jax.random.PRNGKey(0)
    ks = jax.random.split(key, 14)

    Cin, Cmid, K = 72, 32, 3
    f32 = jnp.float32

    fan1 = Cin * K          # kaiming_normal_(mode='fan_in') -> std = sqrt(2/fan_in)
    fan2 = Cmid * 1
    # NOTE: shapes follow the module's __init__; values are synthetic.  The
    # literal init (bn2.gamma = 0) would give an identically-zero eval output,
    # so random BN parameters keep the check meaningful.
    params = {
        "w1": jax.random.normal(ks[1], (Cmid, Cin, K), f32) * jnp.sqrt(2.0 / fan1),
        "b1": jax.random.uniform(ks[2], (Cmid,), f32, -1.0, 1.0) / jnp.sqrt(1.0 * fan1),
        "w2": jax.random.normal(ks[3], (Cin, Cmid, 1), f32) * jnp.sqrt(2.0 / fan2),
        "b2": jax.random.uniform(ks[4], (Cin,), f32, -1.0, 1.0) / jnp.sqrt(1.0 * fan2),
        "g1": 1.0 + 0.1 * jax.random.normal(ks[5], (Cmid,), f32),
        "be1": 0.1 * jax.random.normal(ks[6], (Cmid,), f32),
        "m1": 0.1 * jax.random.normal(ks[7], (Cmid,), f32),
        "v1": jax.random.uniform(ks[8], (Cmid,), f32, 0.5, 1.5),
        "g2": 1.0 + 0.1 * jax.random.normal(ks[9], (Cin,), f32),
        "be2": 0.1 * jax.random.normal(ks[10], (Cin,), f32),
        "m2": 0.1 * jax.random.normal(ks[11], (Cin,), f32),
        "v2": jax.random.uniform(ks[12], (Cin,), f32, 0.5, 1.5),
    }

    # Check 1: small shape, single tile (module-default dilation=1).
    N, L = 2, 16
    x = jax.random.normal(ks[0], (N, Cin, L), f32)
    out = jax.block_until_ready(conv_conv_drop_block(x, params, dilation=1))
    ref = _reference(x, params, dilation=1)
    assert out.shape == (N, Cin, L) and out.dtype == f32
    err = float(jnp.max(jnp.abs(out - ref)))
    assert jnp.allclose(out, ref, atol=1e-4, rtol=1e-4), f"max abs err {err}"

    # Check 2: multi-tile path with cross-tile halos and dilation=2.
    N2, L2 = 1, 384
    x2 = jax.random.normal(ks[13], (N2, Cin, L2), f32)
    out2 = jax.block_until_ready(
        conv_conv_drop_block(x2, params, dilation=2, tile_l=128))
    ref2 = _reference(x2, params, dilation=2)
    assert out2.shape == (N2, Cin, L2)
    err2 = float(jnp.max(jnp.abs(out2 - ref2)))
    assert jnp.allclose(out2, ref2, atol=1e-4, rtol=1e-4), f"max abs err {err2}"

    print("KERNEL_OK")
</pallas_src>

<mosaic_0001>
module attributes {stable_mosaic.version = 11 : i64} {
  func.func @_ccd_kernel(%arg0: i32, %arg1: i32, %arg2: memref<1x72x16xf32, #tpu.memory_space<vmem>>, %arg3: memref<1x1x72x2xf32, #tpu.memory_space<vmem>>, %arg4: memref<3x32x72xf32, #tpu.memory_space<vmem>>, %arg5: memref<72x32xf32, #tpu.memory_space<vmem>>, %arg6: memref<32x1xf32, #tpu.memory_space<vmem>>, %arg7: memref<32x1xf32, #tpu.memory_space<vmem>>, %arg8: memref<72x1xf32, #tpu.memory_space<vmem>>, %arg9: memref<72x1xf32, #tpu.memory_space<vmem>>, %arg10: memref<1x72x16xf32, #tpu.memory_space<vmem>>, %arg11: memref<72x18xf32, #tpu.memory_space<vmem>>) attributes {dimension_semantics = [#tpu.dimension_semantics<parallel>, #tpu.dimension_semantics<parallel>], iteration_bounds = array<i64: 2, 1>, scalar_prefetch = 0 : i64, scratch_operands = 1 : i64, tpu.core_type = #tpu.core_type<tc>, window_params = [{transform_indices = @transform_0, window_bounds = array<i64: 1, 72, 16>}, {transform_indices = @transform_1, window_bounds = array<i64: 1, 1, 72, 2>}, {pipeline_mode = #tpu.pipeline_mode<synchronous>, transform_indices = @transform_2, window_bounds = array<i64: 3, 32, 72>}, {pipeline_mode = #tpu.pipeline_mode<synchronous>, transform_indices = @transform_3, window_bounds = array<i64: 72, 32>}, {pipeline_mode = #tpu.pipeline_mode<synchronous>, transform_indices = @transform_4, window_bounds = array<i64: 32, 1>}, {pipeline_mode = #tpu.pipeline_mode<synchronous>, transform_indices = @transform_5, window_bounds = array<i64: 32, 1>}, {pipeline_mode = #tpu.pipeline_mode<synchronous>, transform_indices = @transform_6, window_bounds = array<i64: 72, 1>}, {pipeline_mode = #tpu.pipeline_mode<synchronous>, transform_indices = @transform_7, window_bounds = array<i64: 72, 1>}, {transform_indices = @transform_8, window_bounds = array<i64: 1, 72, 16>}]} {
    %c0 = arith.constant 0 : index
    %c0_0 = arith.constant 0 : index
    %c0_1 = arith.constant 0 : index
    %0 = vector.load %arg2[%c0, %c0_0, %c0_1] : memref<1x72x16xf32, #tpu.memory_space<vmem>>, vector<1x72x16xf32>
    %1 = vector.shape_cast %0 : vector<1x72x16xf32> to vector<72x16xf32>
    %c16_i32 = arith.constant 16 : i32
    %2 = arith.muli %arg1, %c16_i32 : i32
    %3 = tpu.iota {dimensions = array<i32: 1>} : vector<72x16xi32>
    %4 = vector.broadcast %2 : i32 to vector<72x16xi32>
    %5 = arith.addi %4, %3 : vector<72x16xi32>
    %c16_i32_2 = arith.constant 16 : i32
    %6 = vector.broadcast %c16_i32_2 : i32 to vector<72x16xi32>
    %7 = arith.cmpi slt, %5, %6 : vector<72x16xi32>
    %cst = arith.constant 0.000000e+00 : f32
    %8 = vector.broadcast %cst : f32 to vector<72x16xf32>
    %9 = arith.select %7, %1, %8 : vector<72x16xi1>, vector<72x16xf32>
    %cst_3 = arith.constant 5.000000e-01 : f32
    %10 = vector.broadcast %cst_3 : f32 to vector<72x16xf32>
    %11 = arith.mulf %10, %9 : vector<72x16xf32>
    %cst_4 = arith.constant 0.707106769 : f32
    %12 = vector.broadcast %cst_4 : f32 to vector<72x16xf32>
    %13 = arith.mulf %9, %12 : vector<72x16xf32>
    %14 = math.absf %13 : vector<72x16xf32>
    %cst_5 = arith.constant 0.327591091 : f32
    %15 = vector.broadcast %cst_5 : f32 to vector<72x16xf32>
    %16 = arith.mulf %15, %14 : vector<72x16xf32>
    %cst_6 = arith.constant 1.000000e+00 : f32
    %17 = vector.broadcast %cst_6 : f32 to vector<72x16xf32>
    %18 = arith.addf %17, %16 : vector<72x16xf32>
    %19 = tpu.reciprocal %18 {approx = true} : vector<72x16xf32> -> vector<72x16xf32>
    %20 = arith.mulf %18, %19 : vector<72x16xf32>
    %cst_7 = arith.constant 2.000000e+00 : f32
    %21 = vector.broadcast %cst_7 : f32 to vector<72x16xf32>
    %22 = arith.subf %21, %20 : vector<72x16xf32>
    %23 = arith.mulf %19, %22 : vector<72x16xf32>
    %cst_8 = arith.constant 1.06140542 : f32
    %24 = vector.broadcast %cst_8 : f32 to vector<72x16xf32>
    %25 = arith.mulf %24, %23 : vector<72x16xf32>
    %cst_9 = arith.constant -1.45315206 : f32
    %26 = vector.broadcast %cst_9 : f32 to vector<72x16xf32>
    %27 = arith.addf %25, %26 : vector<72x16xf32>
    %28 = arith.mulf %27, %23 : vector<72x16xf32>
    %cst_10 = arith.constant 1.42141378 : f32
    %29 = vector.broadcast %cst_10 : f32 to vector<72x16xf32>
    %30 = arith.addf %28, %29 : vector<72x16xf32>
    %31 = arith.mulf %30, %23 : vector<72x16xf32>
    %cst_11 = arith.constant -0.284496725 : f32
    %32 = vector.broadcast %cst_11 : f32 to vector<72x16xf32>
    %33 = arith.addf %31, %32 : vector<72x16xf32>
    %34 = arith.mulf %33, %23 : vector<72x16xf32>
    %cst_12 = arith.constant 0.254829586 : f32
    %35 = vector.broadcast %cst_12 : f32 to vector<72x16xf32>
    %36 = arith.addf %34, %35 : vector<72x16xf32>
    %37 = arith.mulf %36, %23 : vector<72x16xf32>
    %cst_13 = arith.constant 0.000000e+00 : f32
    %38 = vector.broadcast %cst_13 : f32 to vector<72x16xf32>
    %39 = arith.subf %38, %14 : vector<72x16xf32>
    %40 = arith.mulf %39, %14 : vector<72x16xf32>
    %41 = math.exp %40 : vector<72x16xf32>
    %42 = arith.mulf %37, %41 : vector<72x16xf32>
    %cst_14 = arith.constant 1.000000e+00 : f32
    %43 = vector.broadcast %cst_14 : f32 to vector<72x16xf32>
    %44 = arith.subf %43, %42 : vector<72x16xf32>
    %cst_15 = arith.constant 0.000000e+00 : f32
    %45 = vector.broadcast %cst_15 : f32 to vector<72x16xf32>
    %46 = arith.cmpf oge, %13, %45 : vector<72x16xf32>
    %cst_16 = arith.constant 0.000000e+00 : f32
    %47 = vector.broadcast %cst_16 : f32 to vector<72x16xf32>
    %48 = arith.subf %47, %44 : vector<72x16xf32>
    %49 = arith.select %46, %44, %48 : vector<72x16xi1>, vector<72x16xf32>
    %cst_17 = arith.constant 1.000000e+00 : f32
    %50 = vector.broadcast %cst_17 : f32 to vector<72x16xf32>
    %51 = arith.addf %50, %49 : vector<72x16xf32>
    %52 = arith.mulf %11, %51 : vector<72x16xf32>
    %c0_18 = arith.constant 0 : index
    %c1 = arith.constant 1 : index
    %53 = vector.load %arg11[%c0_18, %c1] : memref<72x18xf32, #tpu.memory_space<vmem>>, vector<72x16xf32>
    tpu.vector_store %arg11[%c0_18, %c1], %52 {strides = array<i32>} : memref<72x18xf32, #tpu.memory_space<vmem>>, vector<72x16xf32>,
    %c0_19 = arith.constant 0 : index
    %c0_20 = arith.constant 0 : index
    %c0_21 = arith.constant 0 : index
    %c0_22 = arith.constant 0 : index
    %54 = vector.load %arg3[%c0_19, %c0_20, %c0_21, %c0_22] : memref<1x1x72x2xf32, #tpu.memory_space<vmem>>, vector<1x1x72x2xf32>
    %55 = vector.shape_cast %54 : vector<1x1x72x2xf32> to vector<72x2xf32>
    %cst_23 = arith.constant 5.000000e-01 : f32
    %56 = vector.broadcast %cst_23 : f32 to vector<72x2xf32>
    %57 = arith.mulf %56, %55 : vector<72x2xf32>
    %cst_24 = arith.constant 0.707106769 : f32
    %58 = vector.broadcast %cst_24 : f32 to vector<72x2xf32>
    %59 = arith.mulf %55, %58 : vector<72x2xf32>
    %60 = math.absf %59 : vector<72x2xf32>
    %cst_25 = arith.constant 0.327591091 : f32
    %61 = vector.broadcast %cst_25 : f32 to vector<72x2xf32>
    %62 = arith.mulf %61, %60 : vector<72x2xf32>
    %cst_26 = arith.constant 1.000000e+00 : f32
    %63 = vector.broadcast %cst_26 : f32 to vector<72x2xf32>
    %64 = arith.addf %63, %62 : vector<72x2xf32>
    %65 = tpu.reciprocal %64 {approx = true} : vector<72x2xf32> -> vector<72x2xf32>
    %66 = arith.mulf %64, %65 : vector<72x2xf32>
    %cst_27 = arith.constant 2.000000e+00 : f32
    %67 = vector.broadcast %cst_27 : f32 to vector<72x2xf32>
    %68 = arith.subf %67, %66 : vector<72x2xf32>
    %69 = arith.mulf %65, %68 : vector<72x2xf32>
    %cst_28 = arith.constant 1.06140542 : f32
    %70 = vector.broadcast %cst_28 : f32 to vector<72x2xf32>
    %71 = arith.mulf %70, %69 : vector<72x2xf32>
    %cst_29 = arith.constant -1.45315206 : f32
    %72 = vector.broadcast %cst_29 : f32 to vector<72x2xf32>
    %73 = arith.addf %71, %72 : vector<72x2xf32>
    %74 = arith.mulf %73, %69 : vector<72x2xf32>
    %cst_30 = arith.constant 1.42141378 : f32
    %75 = vector.broadcast %cst_30 : f32 to vector<72x2xf32>
    %76 = arith.addf %74, %75 : vector<72x2xf32>
    %77 = arith.mulf %76, %69 : vector<72x2xf32>
    %cst_31 = arith.constant -0.284496725 : f32
    %78 = vector.broadcast %cst_31 : f32 to vector<72x2xf32>
    %79 = arith.addf %77, %78 : vector<72x2xf32>
    %80 = arith.mulf %79, %69 : vector<72x2xf32>
    %cst_32 = arith.constant 0.254829586 : f32
    %81 = vector.broadcast %cst_32 : f32 to vector<72x2xf32>
    %82 = arith.addf %80, %81 : vector<72x2xf32>
    %83 = arith.mulf %82, %69 : vector<72x2xf32>
    %cst_33 = arith.constant 0.000000e+00 : f32
    %84 = vector.broadcast %cst_33 : f32 to vector<72x2xf32>
    %85 = arith.subf %84, %60 : vector<72x2xf32>
    %86 = arith.mulf %85, %60 : vector<72x2xf32>
    %87 = math.exp %86 : vector<72x2xf32>
    %88 = arith.mulf %83, %87 : vector<72x2xf32>
    %cst_34 = arith.constant 1.000000e+00 : f32
    %89 = vector.broadcast %cst_34 : f32 to vector<72x2xf32>
    %90 = arith.subf %89, %88 : vector<72x2xf32>
    %cst_35 = arith.constant 0.000000e+00 : f32
    %91 = vector.broadcast %cst_35 : f32 to vector<72x2xf32>
    %92 = arith.cmpf oge, %59, %91 : vector<72x2xf32>
    %cst_36 = arith.constant 0.000000e+00 : f32
    %93 = vector.broadcast %cst_36 : f32 to vector<72x2xf32>
    %94 = arith.subf %93, %90 : vector<72x2xf32>
    %95 = arith.select %92, %90, %94 : vector<72x2xi1>, vector<72x2xf32>
    %cst_37 = arith.constant 1.000000e+00 : f32
    %96 = vector.broadcast %cst_37 : f32 to vector<72x2xf32>
    %97 = arith.addf %96, %95 : vector<72x2xf32>
    %98 = arith.mulf %57, %97 : vector<72x2xf32>
    %99 = vector.extract_strided_slice %98 {offsets = [0, 0], sizes = [72, 1], strides = [1, 1]} : vector<72x2xf32> to vector<72x1xf32>
    %c0_38 = arith.constant 0 : index
    %c0_39 = arith.constant 0 : index
    %100 = vector.load %arg11[%c0_38, %c0_39] : memref<72x18xf32, #tpu.memory_space<vmem>>, vector<72x1xf32>
    tpu.vector_store %arg11[%c0_38, %c0_39], %99 {strides = array<i32>} : memref<72x18xf32, #tpu.memory_space<vmem>>, vector<72x1xf32>,
    %101 = vector.extract_strided_slice %98 {offsets = [0, 1], sizes = [72, 1], strides = [1, 1]} : vector<72x2xf32> to vector<72x1xf32>
    %c0_40 = arith.constant 0 : index
    %c17 = arith.constant 17 : index
    %102 = vector.load %arg11[%c0_40, %c17] : memref<72x18xf32, #tpu.memory_space<vmem>>, vector<72x1xf32>
    tpu.vector_store %arg11[%c0_40, %c17], %101 {strides = array<i32>} : memref<72x18xf32, #tpu.memory_space<vmem>>, vector<72x1xf32>,
    %cst_41 = arith.constant 0.000000e+00 : f32
    %103 = vector.broadcast %cst_41 : f32 to vector<32x16xf32>
    %c0_42 = arith.constant 0 : index
    %c0_43 = arith.constant 0 : index
    %c0_44 = arith.constant 0 : index
    %104 = vector.load %arg4[%c0_42, %c0_43, %c0_44] : memref<3x32x72xf32, #tpu.memory_space<vmem>>, vector<1x32x72xf32>
    %105 = vector.shape_cast %104 : vector<1x32x72xf32> to vector<32x72xf32>
    %c0_45 = arith.constant 0 : index
    %c0_46 = arith.constant 0 : index
    %106 = vector.load %arg11[%c0_45, %c0_46] : memref<72x18xf32, #tpu.memory_space<vmem>>, vector<72x16xf32>
    %cst_47 = arith.constant dense<0.000000e+00> : vector<32x16xf32>
    %107 = tpu.matmul %105, %106, %cst_47 {dimension_numbers = #tpu.dot_dimension_numbers<[1], [0], [0], [1], [0, 0, 1, 1], [], []>} : vector<32x72xf32>, vector<72x16xf32>, vector<32x16xf32> -> vector<32x16xf32>
    %108 = arith.addf %103, %107 : vector<32x16xf32>
    %c1_48 = arith.constant 1 : index
    %c0_49 = arith.constant 0 : index
    %c0_50 = arith.constant 0 : index
    %109 = vector.load %arg4[%c1_48, %c0_49, %c0_50] : memref<3x32x72xf32, #tpu.memory_space<vmem>>, vector<1x32x72xf32>
    %110 = vector.shape_cast %109 : vector<1x32x72xf32> to vector<32x72xf32>
    %c0_51 = arith.constant 0 : index
    %c1_52 = arith.constant 1 : index
    %111 = vector.load %arg11[%c0_51, %c1_52] : memref<72x18xf32, #tpu.memory_space<vmem>>, vector<72x16xf32>
    %cst_53 = arith.constant dense<0.000000e+00> : vector<32x16xf32>
    %112 = tpu.matmul %110, %111, %cst_53 {dimension_numbers = #tpu.dot_dimension_numbers<[1], [0], [0], [1], [0, 0, 1, 1], [], []>} : vector<32x72xf32>, vector<72x16xf32>, vector<32x16xf32> -> vector<32x16xf32>
    %113 = arith.addf %108, %112 : vector<32x16xf32>
    %c2 = arith.constant 2 : index
    %c0_54 = arith.constant 0 : index
    %c0_55 = arith.constant 0 : index
    %114 = vector.load %arg4[%c2, %c0_54, %c0_55] : memref<3x32x72xf32, #tpu.memory_space<vmem>>, vector<1x32x72xf32>
    %115 = vector.shape_cast %114 : vector<1x32x72xf32> to vector<32x72xf32>
    %c0_56 = arith.constant 0 : index
    %c2_57 = arith.constant 2 : index
    %116 = vector.load %arg11[%c0_56, %c2_57] : memref<72x18xf32, #tpu.memory_space<vmem>>, vector<72x16xf32>
    %cst_58 = arith.constant dense<0.000000e+00> : vector<32x16xf32>
    %117 = tpu.matmul %115, %116, %cst_58 {dimension_numbers = #tpu.dot_dimension_numbers<[1], [0], [0], [1], [0, 0, 1, 1], [], []>} : vector<32x72xf32>, vector<72x16xf32>, vector<32x16xf32> -> vector<32x16xf32>
    %118 = arith.addf %113, %117 : vector<32x16xf32>
    %c0_59 = arith.constant 0 : index
    %c0_60 = arith.constant 0 : index
    %119 = vector.load %arg6[%c0_59, %c0_60] : memref<32x1xf32, #tpu.memory_space<vmem>>, vector<32x1xf32>
    %120 = vector.broadcast %119 : vector<32x1xf32> to vector<32x16xf32>
    %121 = arith.mulf %118, %120 : vector<32x16xf32>
    %c0_61 = arith.constant 0 : index
    %c0_62 = arith.constant 0 : index
    %122 = vector.load %arg7[%c0_61, %c0_62] : memref<32x1xf32, #tpu.memory_space<vmem>>, vector<32x1xf32>
    %123 = vector.broadcast %122 : vector<32x1xf32> to vector<32x16xf32>
    %124 = arith.addf %121, %123 : vector<32x16xf32>
    %cst_63 = arith.constant 5.000000e-01 : f32
    %125 = vector.broadcast %cst_63 : f32 to vector<32x16xf32>
    %126 = arith.mulf %125, %124 : vector<32x16xf32>
    %cst_64 = arith.constant 0.707106769 : f32
    %127 = vector.broadcast %cst_64 : f32 to vector<32x16xf32>
    %128 = arith.mulf %124, %127 : vector<32x16xf32>
    %129 = math.absf %128 : vector<32x16xf32>
    %cst_65 = arith.constant 0.327591091 : f32
    %130 = vector.broadcast %cst_65 : f32 to vector<32x16xf32>
    %131 = arith.mulf %130, %129 : vector<32x16xf32>
    %cst_66 = arith.constant 1.000000e+00 : f32
    %132 = vector.broadcast %cst_66 : f32 to vector<32x16xf32>
    %133 = arith.addf %132, %131 : vector<32x16xf32>
    %134 = tpu.reciprocal %133 {approx = true} : vector<32x16xf32> -> vector<32x16xf32>
    %135 = arith.mulf %133, %134 : vector<32x16xf32>
    %cst_67 = arith.constant 2.000000e+00 : f32
    %136 = vector.broadcast %cst_67 : f32 to vector<32x16xf32>
    %137 = arith.subf %136, %135 : vector<32x16xf32>
    %138 = arith.mulf %134, %137 : vector<32x16xf32>
    %cst_68 = arith.constant 1.06140542 : f32
    %139 = vector.broadcast %cst_68 : f32 to vector<32x16xf32>
    %140 = arith.mulf %139, %138 : vector<32x16xf32>
    %cst_69 = arith.constant -1.45315206 : f32
    %141 = vector.broadcast %cst_69 : f32 to vector<32x16xf32>
    %142 = arith.addf %140, %141 : vector<32x16xf32>
    %143 = arith.mulf %142, %138 : vector<32x16xf32>
    %cst_70 = arith.constant 1.42141378 : f32
    %144 = vector.broadcast %cst_70 : f32 to vector<32x16xf32>
    %145 = arith.addf %143, %144 : vector<32x16xf32>
    %146 = arith.mulf %145, %138 : vector<32x16xf32>
    %cst_71 = arith.constant -0.284496725 : f32
    %147 = vector.broadcast %cst_71 : f32 to vector<32x16xf32>
    %148 = arith.addf %146, %147 : vector<32x16xf32>
    %149 = arith.mulf %148, %138 : vector<32x16xf32>
    %cst_72 = arith.constant 0.254829586 : f32
    %150 = vector.broadcast %cst_72 : f32 to vector<32x16xf32>
    %151 = arith.addf %149, %150 : vector<32x16xf32>
    %152 = arith.mulf %151, %138 : vector<32x16xf32>
    %cst_73 = arith.constant 0.000000e+00 : f32
    %153 = vector.broadcast %cst_73 : f32 to vector<32x16xf32>
    %154 = arith.subf %153, %129 : vector<32x16xf32>
    %155 = arith.mulf %154, %129 : vector<32x16xf32>
    %156 = math.exp %155 : vector<32x16xf32>
    %157 = arith.mulf %152, %156 : vector<32x16xf32>
    %cst_74 = arith.constant 1.000000e+00 : f32
    %158 = vector.broadcast %cst_74 : f32 to vector<32x16xf32>
    %159 = arith.subf %158, %157 : vector<32x16xf32>
    %cst_75 = arith.constant 0.000000e+00 : f32
    %160 = vector.broadcast %cst_75 : f32 to vector<32x16xf32>
    %161 = arith.cmpf oge, %128, %160 : vector<32x16xf32>
    %cst_76 = arith.constant 0.000000e+00 : f32
    %162 = vector.broadcast %cst_76 : f32 to vector<32x16xf32>
    %163 = arith.subf %162, %159 : vector<32x16xf32>
    %164 = arith.select %161, %159, %163 : vector<32x16xi1>, vector<32x16xf32>
    %cst_77 = arith.constant 1.000000e+00 : f32
    %165 = vector.broadcast %cst_77 : f32 to vector<32x16xf32>
    %166 = arith.addf %165, %164 : vector<32x16xf32>
    %167 = arith.mulf %126, %166 : vector<32x16xf32>
    %c0_78 = arith.constant 0 : index
    %c0_79 = arith.constant 0 : index
    %168 = vector.load %arg5[%c0_78, %c0_79] : memref<72x32xf32, #tpu.memory_space<vmem>>, vector<72x32xf32>
    %cst_80 = arith.constant dense<0.000000e+00> : vector<72x16xf32>
    %169 = tpu.matmul %168, %167, %cst_80 {dimension_numbers = #tpu.dot_dimension_numbers<[1], [0], [0], [1], [0, 0, 1, 1], [], []>} : vector<72x32xf32>, vector<32x16xf32>, vector<72x16xf32> -> vector<72x16xf32>
    %c0_81 = arith.constant 0 : index
    %c0_82 = arith.constant 0 : index
    %170 = vector.load %arg8[%c0_81, %c0_82] : memref<72x1xf32, #tpu.memory_space<vmem>>, vector<72x1xf32>
    %171 = vector.broadcast %170 : vector<72x1xf32> to vector<72x16xf32>
    %172 = arith.mulf %169, %171 : vector<72x16xf32>
    %c0_83 = arith.constant 0 : index
    %c0_84 = arith.constant 0 : index
    %173 = vector.load %arg9[%c0_83, %c0_84] : memref<72x1xf32, #tpu.memory_space<vmem>>, vector<72x1xf32>
    %174 = vector.broadcast %173 : vector<72x1xf32> to vector<72x16xf32>
    %175 = arith.addf %172, %174 : vector<72x16xf32>
    %c0_85 = arith.constant 0 : index
    %c0_86 = arith.constant 0 : index
    %c0_87 = arith.constant 0 : index
    %176 = vector.load %arg10[%c0_85, %c0_86, %c0_87] : memref<1x72x16xf32, #tpu.memory_space<vmem>>, vector<1x72x16xf32>
    %177 = vector.shape_cast %176 : vector<1x72x16xf32> to vector<72x16xf32>
    %178 = vector.shape_cast %175 : vector<72x16xf32> to vector<1x72x16xf32>
    tpu.vector_store %arg10[%c0_85, %c0_86, %c0_87], %178 {strides = array<i32>} : memref<1x72x16xf32, #tpu.memory_space<vmem>>, vector<1x72x16xf32>,
    return
  }
  func.func @transform_0(%arg0: i32, %arg1: i32) -> (i32, i32, i32) {
    %c0_i32 = arith.constant 0 : i32
    %c0_i32_0 = arith.constant 0 : i32
    return %arg0, %c0_i32, %arg1 : i32, i32, i32
  }
  func.func @transform_1(%arg0: i32, %arg1: i32) -> (i32, i32, i32, i32) {
    %c0_i32 = arith.constant 0 : i32
    %c0_i32_0 = arith.constant 0 : i32
    %c0_i32_1 = arith.constant 0 : i32
    return %arg0, %arg1, %c0_i32, %c0_i32_0 : i32, i32, i32, i32
  }
  func.func @transform_2(%arg0: i32, %arg1: i32) -> (i32, i32, i32) {
    %c0_i32 = arith.constant 0 : i32
    %c0_i32_0 = arith.constant 0 : i32
    %c0_i32_1 = arith.constant 0 : i32
    %c0_i32_2 = arith.constant 0 : i32
    return %c0_i32, %c0_i32_0, %c0_i32_1 : i32, i32, i32
  }
  func.func @transform_3(%arg0: i32, %arg1: i32) -> (i32, i32) {
    %c0_i32 = arith.constant 0 : i32
    %c0_i32_0 = arith.constant 0 : i32
    %c0_i32_1 = arith.constant 0 : i32
    return %c0_i32, %c0_i32_0 : i32, i32
  }
  func.func @transform_4(%arg0: i32, %arg1: i32) -> (i32, i32) {
    %c0_i32 = arith.constant 0 : i32
    %c0_i32_0 = arith.constant 0 : i32
    %c0_i32_1 = arith.constant 0 : i32
    return %c0_i32, %c0_i32_0 : i32, i32
  }
  func.func @transform_5(%arg0: i32, %arg1: i32) -> (i32, i32) {
    %c0_i32 = arith.constant 0 : i32
    %c0_i32_0 = arith.constant 0 : i32
    %c0_i32_1 = arith.constant 0 : i32
    return %c0_i32, %c0_i32_0 : i32, i32
  }
  func.func @transform_6(%arg0: i32, %arg1: i32) -> (i32, i32) {
    %c0_i32 = arith.constant 0 : i32
    %c0_i32_0 = arith.constant 0 : i32
    %c0_i32_1 = arith.constant 0 : i32
    return %c0_i32, %c0_i32_0 : i32, i32
  }
  func.func @transform_7(%arg0: i32, %arg1: i32) -> (i32, i32) {
    %c0_i32 = arith.constant 0 : i32
    %c0_i32_0 = arith.constant 0 : i32
    %c0_i32_1 = arith.constant 0 : i32
    return %c0_i32, %c0_i32_0 : i32, i32
  }
  func.func @transform_8(%arg0: i32, %arg1: i32) -> (i32, i32, i32) {
    %c0_i32 = arith.constant 0 : i32
    %c0_i32_0 = arith.constant 0 : i32
    return %arg0, %c0_i32, %arg1 : i32, i32, i32
  }
}

</mosaic_0001>

<llo_original>
// kernel: tpu_custom_call.1
$region0: #{tpu_custom_call.1}
  #allocation0 [shape = 'u32[]', space=smem, size = 0x4, offset = 0x4, fixed_abs, tag = 'smem constant byte address 0x4 - core index']
  #allocation1 [shape = 'u32[72,128]{1,0:T(1,128)}', space=vmem, size = 0x9000, scoped, tag = 'internal scratch']
  #allocation2 [shape = 'f32[72,18]{1,0:T(8,128)}', space=vmem, size = 0x9000, scoped, tag = 'scratch operand']
  %s0 = inlined_call_operand.vmem [shape: f32[2,72,16], index: 0, kind: input, shape index: {}]
  %s1 = inlined_call_operand.vmem [shape: f32[2,1,72,2], index: 1, kind: input, shape index: {}]
  %s2 = inlined_call_operand.vmem [shape: f32[3,32,72], index: 2, kind: input, shape index: {}]
  %s3 = inlined_call_operand.vmem [shape: f32[72,32], index: 3, kind: input, shape index: {}]
  %s4 = inlined_call_operand.vmem [shape: f32[32,1], index: 4, kind: input, shape index: {}]
  %s5 = inlined_call_operand.vmem [shape: f32[32,1], index: 5, kind: input, shape index: {}]
  %s6 = inlined_call_operand.vmem [shape: f32[72,1], index: 6, kind: input, shape index: {}]
  %s7 = inlined_call_operand.vmem [shape: f32[72,1], index: 7, kind: input, shape index: {}]
  %s8 = inlined_call_operand.vmem [shape: f32[2,72,16], index: 8, kind: output, shape index: {}]
  %s9 = sld [smem:[#allocation0]]
  $region65: #{tpu_custom_call.1} parent=0
    _
  %s11 = ssub.s32 1, %s9
  %s12 = scalar_select 0, %s11, %s9
  loop: start=0, step=1, limit=4
  $region2: #{tpu_custom_call.1} parent=0 // loop_pre_header
    _
  $region3: #{tpu_custom_call.1} parent=0 // loop_header
    %s14 = sphi 0, %s18
    %p15 = scmp.ge.s32.totalorder %s14, 4
    %s21 = sphi 0, %s33
    %s22 = sphi 0, %s29
    %s23 = sphi 0, %s21
    %s24 = sphi 0, %s22
    %s25 = sphi 0, %s23
    %s26 = sphi 0, %s24
    %s38 = sphi 0, %s40
    %s41 = sphi 0, %s38
    %s42 = sphi 0, %s41
    %s58 = sphi 0, %s42
    %s66 = sphi 0, %s68
    %s69 = sphi 0, %s66
    %s70 = sphi 0, %s69
    %s86 = sphi 0, %s70
    %s90 = sphi 0, %s90
    %s92 = sphi 0, %s90
    %s93 = sphi 0, %s92
    %s107 = sphi 0, %s93
    %s111 = sphi 0, %s111
    %s113 = sphi 0, %s111
    %s114 = sphi 0, %s113
    %s128 = sphi 0, %s114
    %s132 = sphi 0, %s132
    %s134 = sphi 0, %s132
    %s135 = sphi 0, %s134
    %s149 = sphi 0, %s135
    %s153 = sphi 0, %s153
    %s155 = sphi 0, %s153
    %s156 = sphi 0, %s155
    %s170 = sphi 0, %s156
    %s174 = sphi 0, %s174
    %s176 = sphi 0, %s174
    %s177 = sphi 0, %s176
    %s191 = sphi 0, %s177
    %s195 = sphi 0, %s195
    %s197 = sphi 0, %s195
    %s198 = sphi 0, %s197
    %s212 = sphi 0, %s198
    %s220 = sphi 0, %s222
    %s223 = sphi 0, %s220
    %s224 = sphi 0, %s223
    %s240 = sphi 0, %s224
  $region4: #{tpu_custom_call.1} parent=0 // loop_header_branch
    %17 = sbr.rel (%p15) target = $region8
  $region5: #{tpu_custom_call.1} parent=0 // loop_body
    %s19 = ssub.s32 %s14, 1
    %s20 = ssub.s32 %s14, 2
    %s27 = sadd.s32 1, %s22
    %p28 = scmp.ge.s32.totalorder %s27, 1
    %s29 = scalar_select %p28, 0, %s27
    %s30 = sadd.s32 1, %s21
    %s31 = scalar_select %p28, %s30, %s21
    %p32 = scmp.ge.s32.totalorder %s31, 2
    %s33 = scalar_select %p32, 0, %s31
    %s34 = ssub.s32 %s21, %s33
    %s35 = ssub.s32 %s22, %s29
    %s36 = sor.u32 %s34, %s35
    %p37 = scmp.eq.s32.totalorder %s36, 0
    %s39 = sadd.s32 %s38, 1
    %s40 = scalar_select %p37, %s38, %s39
    %p43 = pneg %p37
    %p44 = scmp.eq.s32.totalorder %s14, 1
    %p45 = por %p43, %p44
    %p46 = scmp.ne.s32.totalorder %s38, %s41
    %p47 = scmp.eq.s32.totalorder %s14, 0
    %p48 = por %p46, %p47
    %p49 = scmp.ne.s32.totalorder %s38, %s41
    %p50 = scmp.eq.s32.totalorder %s19, 1
    %p51 = por %p49, %p50
    %p52 = scmp.ne.s32.totalorder %s41, %s42
    %p53 = scmp.eq.s32.totalorder %s19, 0
    %p54 = por %p52, %p53
    %p55 = scmp.ne.s32.totalorder %s41, %s42
    %p56 = scmp.eq.s32.totalorder %s20, 1
    %p57 = por %p55, %p56
    %p59 = scmp.ne.s32.totalorder %s42, %s58
    %p60 = scmp.eq.s32.totalorder %s20, 0
    %p61 = por %p59, %p60
    %s62 = ssub.s32 %s21, %s33
    %s63 = ssub.s32 %s22, %s29
    %s64 = sor.u32 %s62, %s63
    %p65 = scmp.eq.s32.totalorder %s64, 0
    %s67 = sadd.s32 %s66, 1
    %s68 = scalar_select %p65, %s66, %s67
    %p71 = pneg %p65
    %p72 = scmp.eq.s32.totalorder %s14, 1
    %p73 = por %p71, %p72
    %p74 = scmp.ne.s32.totalorder %s66, %s69
    %p75 = scmp.eq.s32.totalorder %s14, 0
    %p76 = por %p74, %p75
    %p77 = scmp.ne.s32.totalorder %s66, %s69
    %p78 = scmp.eq.s32.totalorder %s19, 1
    %p79 = por %p77, %p78
    %p80 = scmp.ne.s32.totalorder %s69, %s70
    %p81 = scmp.eq.s32.totalorder %s19, 0
    %p82 = por %p80, %p81
    %p83 = scmp.ne.s32.totalorder %s69, %s70
    %p84 = scmp.eq.s32.totalorder %s20, 1
    %p85 = por %p83, %p84
    %p87 = scmp.ne.s32.totalorder %s70, %s86
    %p88 = scmp.eq.s32.totalorder %s20, 0
    %p89 = por %p87, %p88
    %s91 = sadd.s32 %s90, 1
    %p94 = scmp.eq.s32.totalorder %s14, 1
    %p95 = scmp.ne.s32.totalorder %s90, %s92
    %p96 = scmp.eq.s32.totalorder %s14, 0
    %p97 = por %p95, %p96
    %p98 = scmp.ne.s32.totalorder %s90, %s92
    %p99 = scmp.eq.s32.totalorder %s19, 1
    %p100 = por %p98, %p99
    %p101 = scmp.ne.s32.totalorder %s92, %s93
    %p102 = scmp.eq.s32.totalorder %s19, 0
    %p103 = por %p101, %p102
    %p104 = scmp.ne.s32.totalorder %s92, %s93
    %p105 = scmp.eq.s32.totalorder %s20, 1
    %p106 = por %p104, %p105
    %p108 = scmp.ne.s32.totalorder %s93, %s107
    %p109 = scmp.eq.s32.totalorder %s20, 0
    %p110 = por %p108, %p109
    %s112 = sadd.s32 %s111, 1
    %p115 = scmp.eq.s32.totalorder %s14, 1
    %p116 = scmp.ne.s32.totalorder %s111, %s113
    %p117 = scmp.eq.s32.totalorder %s14, 0
    %p118 = por %p116, %p117
    %p119 = scmp.ne.s32.totalorder %s111, %s113
    %p120 = scmp.eq.s32.totalorder %s19, 1
    %p121 = por %p119, %p120
    %p122 = scmp.ne.s32.totalorder %s113, %s114
    %p123 = scmp.eq.s32.totalorder %s19, 0
    %p124 = por %p122, %p123
    %p125 = scmp.ne.s32.totalorder %s113, %s114
    %p126 = scmp.eq.s32.totalorder %s20, 1
    %p127 = por %p125, %p126
    %p129 = scmp.ne.s32.totalorder %s114, %s128
    %p130 = scmp.eq.s32.totalorder %s20, 0
    %p131 = por %p129, %p130
    %s133 = sadd.s32 %s132, 1
    %p136 = scmp.eq.s32.totalorder %s14, 1
    %p137 = scmp.ne.s32.totalorder %s132, %s134
    %p138 = scmp.eq.s32.totalorder %s14, 0
    %p139 = por %p137, %p138
    %p140 = scmp.ne.s32.totalorder %s132, %s134
    %p141 = scmp.eq.s32.totalorder %s19, 1
    %p142 = por %p140, %p141
    %p143 = scmp.ne.s32.totalorder %s134, %s135
    %p144 = scmp.eq.s32.totalorder %s19, 0
    %p145 = por %p143, %p144
    %p146 = scmp.ne.s32.totalorder %s134, %s135
    %p147 = scmp.eq.s32.totalorder %s20, 1
    %p148 = por %p146, %p147
    %p150 = scmp.ne.s32.totalorder %s135, %s149
    %p151 = scmp.eq.s32.totalorder %s20, 0
    %p152 = por %p150, %p151
    %s154 = sadd.s32 %s153, 1
    %p157 = scmp.eq.s32.totalorder %s14, 1
    %p158 = scmp.ne.s32.totalorder %s153, %s155
    %p159 = scmp.eq.s32.totalorder %s14, 0
    %p160 = por %p158, %p159
    %p161 = scmp.ne.s32.totalorder %s153, %s155
    %p162 = scmp.eq.s32.totalorder %s19, 1
    %p163 = por %p161, %p162
    %p164 = scmp.ne.s32.totalorder %s155, %s156
    %p165 = scmp.eq.s32.totalorder %s19, 0
    %p166 = por %p164, %p165
    %p167 = scmp.ne.s32.totalorder %s155, %s156
    %p168 = scmp.eq.s32.totalorder %s20, 1
    %p169 = por %p167, %p168
    %p171 = scmp.ne.s32.totalorder %s156, %s170
    %p172 = scmp.eq.s32.totalorder %s20, 0
    %p173 = por %p171, %p172
    %s175 = sadd.s32 %s174, 1
    %p178 = scmp.eq.s32.totalorder %s14, 1
    %p179 = scmp.ne.s32.totalorder %s174, %s176
    %p180 = scmp.eq.s32.totalorder %s14, 0
    %p181 = por %p179, %p180
    %p182 = scmp.ne.s32.totalorder %s174, %s176
    %p183 = scmp.eq.s32.totalorder %s19, 1
    %p184 = por %p182, %p183
    %p185 = scmp.ne.s32.totalorder %s176, %s177
    %p186 = scmp.eq.s32.totalorder %s19, 0
    %p187 = por %p185, %p186
    %p188 = scmp.ne.s32.totalorder %s176, %s177
    %p189 = scmp.eq.s32.totalorder %s20, 1
    %p190 = por %p188, %p189
    %p192 = scmp.ne.s32.totalorder %s177, %s191
    %p193 = scmp.eq.s32.totalorder %s20, 0
    %p194 = por %p192, %p193
    %s196 = sadd.s32 %s195, 1
    %p199 = scmp.eq.s32.totalorder %s14, 1
    %p200 = scmp.ne.s32.totalorder %s195, %s197
    %p201 = scmp.eq.s32.totalorder %s14, 0
    %p202 = por %p200, %p201
    %p203 = scmp.ne.s32.totalorder %s195, %s197
    %p204 = scmp.eq.s32.totalorder %s19, 1
    %p205 = por %p203, %p204
    %p206 = scmp.ne.s32.totalorder %s197, %s198
    %p207 = scmp.eq.s32.totalorder %s19, 0
    %p208 = por %p206, %p207
    %p209 = scmp.ne.s32.totalorder %s197, %s198
    %p210 = scmp.eq.s32.totalorder %s20, 1
    %p211 = por %p209, %p210
    %p213 = scmp.ne.s32.totalorder %s198, %s212
    %p214 = scmp.eq.s32.totalorder %s20, 0
    %p215 = por %p213, %p214
    %s216 = ssub.s32 %s21, %s33
    %s217 = ssub.s32 %s22, %s29
    %s218 = sor.u32 %s216, %s217
    %p219 = scmp.eq.s32.totalorder %s218, 0
    %s221 = sadd.s32 %s220, 1
    %s222 = scalar_select %p219, %s220, %s221
    %p225 = pneg %p219
    %p226 = scmp.eq.s32.totalorder %s14, 1
    %p227 = por %p225, %p226
    %p228 = scmp.ne.s32.totalorder %s220, %s223
    %p229 = scmp.eq.s32.totalorder %s14, 0
    %p230 = por %p228, %p229
    %p231 = scmp.ne.s32.totalorder %s220, %s223
    %p232 = scmp.eq.s32.totalorder %s19, 1
    %p233 = por %p231, %p232
    %p234 = scmp.ne.s32.totalorder %s223, %s224
    %p235 = scmp.eq.s32.totalorder %s19, 0
    %p236 = por %p234, %p235
    %p237 = scmp.ne.s32.totalorder %s223, %s224
    %p238 = scmp.eq.s32.totalorder %s20, 1
    %p239 = por %p237, %p238
    %p241 = scmp.ne.s32.totalorder %s224, %s240
    %p242 = scmp.eq.s32.totalorder %s20, 0
    %p243 = por %p241, %p242
    %p244 = scmp.le.s32.totalorder 1, %s14
    %p245 = scmp.lt.s32.totalorder %s14, 3
    %p246 = pnand %p244, %p245
    %p247 = pneg %p246
    // Predicated region
    $region9: #{tpu_custom_call.1} parent=5 // pred_check
      _
    $region10: #{tpu_custom_call.1} parent=5 // pred_check_branch
      %249 = sbr.rel (%p246) target = $region12
    $region11: #{tpu_custom_call.1} parent=5 // pred_region
      %s250 = ssub.s32 %s14, 1
      // Predicated region
      $region13: #{tpu_custom_call.1} parent=11 // pred_check
        %p251 = pneg %p103
      $region14: #{tpu_custom_call.1} parent=11 // pred_check_branch
        %253 = sbr.rel (%p251) target = $region16
      $region15: #{tpu_custom_call.1} parent=11 // pred_region
        _
      $region16: #{tpu_custom_call.1} parent=11 // pred_fallthru
        _
      // Predicated region
      $region17: #{tpu_custom_call.1} parent=11 // pred_check
        %p254 = pneg %p124
      $region18: #{tpu_custom_call.1} parent=11 // pred_check_branch
        %256 = sbr.rel (%p254) target = $region20
      $region19: #{tpu_custom_call.1} parent=11 // pred_region
        _
      $region20: #{tpu_custom_call.1} parent=11 // pred_fallthru
        _
      // Predicated region
      $region21: #{tpu_custom_call.1} parent=11 // pred_check
        %p257 = pneg %p145
      $region22: #{tpu_custom_call.1} parent=11 // pred_check_branch
        %259 = sbr.rel (%p257) target = $region24
      $region23: #{tpu_custom_call.1} parent=11 // pred_region
        _
      $region24: #{tpu_custom_call.1} parent=11 // pred_fallthru
        _
      // Predicated region
      $region25: #{tpu_custom_call.1} parent=11 // pred_check
        %p260 = pneg %p166
      $region26: #{tpu_custom_call.1} parent=11 // pred_check_branch
        %262 = sbr.rel (%p260) target = $region28
      $region27: #{tpu_custom_call.1} parent=11 // pred_region
        _
      $region28: #{tpu_custom_call.1} parent=11 // pred_fallthru
        _
      // Predicated region
      $region29: #{tpu_custom_call.1} parent=11 // pred_check
        %p263 = pneg %p187
      $region30: #{tpu_custom_call.1} parent=11 // pred_check_branch
        %265 = sbr.rel (%p263) target = $region32
      $region31: #{tpu_custom_call.1} parent=11 // pred_region
        _
      $region32: #{tpu_custom_call.1} parent=11 // pred_fallthru
        _
      // Predicated region
      $region33: #{tpu_custom_call.1} parent=11 // pred_check
        %p266 = pneg %p208
      $region34: #{tpu_custom_call.1} parent=11 // pred_check_branch
        %268 = sbr.rel (%p266) target = $region36
      $region35: #{tpu_custom_call.1} parent=11 // pred_region
        _
      $region36: #{tpu_custom_call.1} parent=11 // pred_fallthru
        _
    $region12: #{tpu_custom_call.1} parent=5 // pred_fallthru
      _
    %p269 = scmp.lt.s32.totalorder %s14, 2
    // Predicated region
    $region37: #{tpu_custom_call.1} parent=5 // pred_check
      %p270 = pneg %p269
    $region38: #{tpu_custom_call.1} parent=5 // pred_check_branch
      %272 = sbr.rel (%p270) target = $region40
    $region39: #{tpu_custom_call.1} parent=5 // pred_region
      // Predicated region
      $region41: #{tpu_custom_call.1} parent=39 // pred_check
        %p273 = pneg %p48
      $region42: #{tpu_custom_call.1} parent=39 // pred_check_branch
        %275 = sbr.rel (%p273) target = $region44
      $region43: #{tpu_custom_call.1} parent=39 // pred_region
        %p276 = scmp.lt.s32.totalorder %s21, 1
        %s277 = scalar_select %p276, %s21, 1
        %p278 = scmp.lt.s32.totalorder %s22, 0
        %s279 = scalar_select %p278, %s22, 0
        %s280 = smul.addr %s277, 9
        %s281 = sadd.s32 %s279, %s280
        %s282 = smul.addr %s281, 8
        %s283 = scalar_lea.vmem %s0, %s282
      $region44: #{tpu_custom_call.1} parent=39 // pred_fallthru
        _
      // Predicated region
      $region45: #{tpu_custom_call.1} parent=39 // pred_check
        %p284 = pneg %p76
      $region46: #{tpu_custom_call.1} parent=39 // pred_check_branch
        %286 = sbr.rel (%p284) target = $region48
      $region47: #{tpu_custom_call.1} parent=39 // pred_region
        %p287 = scmp.lt.s32.totalorder %s21, 1
        %s288 = scalar_select %p287, %s21, 1
        %p289 = scmp.lt.s32.totalorder %s22, 0
        %s290 = scalar_select %p289, %s22, 0
        %s291 = smul.addr %s290, 9
        %s292 = smul.addr %s288, 9
        %s293 = sadd.s32 %s291, %s292
        %s294 = smul.addr %s293, 8
        %s295 = scalar_lea.vmem %s1, %s294
      $region48: #{tpu_custom_call.1} parent=39 // pred_fallthru
        _
    $region40: #{tpu_custom_call.1} parent=5 // pred_fallthru
      _
    %p296 = scmp.le.s32.totalorder 1, %s14
    %p297 = scmp.lt.s32.totalorder %s14, 3
    %p298 = pnand %p296, %p297
    %p299 = pneg %p298
    // Predicated region
    $region49: #{tpu_custom_call.1} parent=5 // pred_check
      _
    $region50: #{tpu_custom_call.1} parent=5 // pred_check_branch
      %301 = sbr.rel (%p298) target = $region52
    $region51: #{tpu_custom_call.1} parent=5 // pred_region
      %s302 = ssub.s32 %s14, 1
      %p303 = scmp.lt.s32.totalorder %s23, 1
      %s304 = scalar_select %p303, %s23, 1
      %p305 = scmp.lt.s32.totalorder %s24, 0
      %s306 = scalar_select %p305, %s24, 0
      %s307 = smul.addr %s304, 9
      %s308 = sadd.s32 %s306, %s307
      %s309 = smul.addr %s308, 8
      %s310 = scalar_lea.vmem %s0, %s309
      %p311 = pneg %p54
      %p312 = pneg %p51
      %p313 = scmp.lt.s32.totalorder %s23, 1
      %s314 = scalar_select %p313, %s23, 1
      %p315 = scmp.lt.s32.totalorder %s24, 0
      %s316 = scalar_select %p315, %s24, 0
      %s317 = smul.addr %s316, 9
      %s318 = smul.addr %s314, 9
      %s319 = sadd.s32 %s317, %s318
      %s320 = smul.addr %s319, 8
      %s321 = scalar_lea.vmem %s1, %s320
      %p322 = pneg %p82
      %p323 = pneg %p79
      %p324 = pneg %p103
      %p325 = pneg %p100
      %p326 = pneg %p124
      %p327 = pneg %p121
      %p328 = pneg %p145
      %p329 = pneg %p142
      %p330 = pneg %p166
      %p331 = pneg %p163
      %p332 = pneg %p187
      %p333 = pneg %p184
      %p334 = pneg %p208
      %p335 = pneg %p205
      %p336 = pneg %p236
      %p337 = pneg %p233
      %p338 = scmp.lt.s32.totalorder %s23, 1
      %s339 = scalar_select %p338, %s23, 1
      %p340 = scmp.lt.s32.totalorder %s24, 0
      %s341 = scalar_select %p340, %s24, 0
      %s342 = smul.addr %s339, 9
      %s343 = sadd.s32 %s341, %s342
      %s344 = smul.addr %s343, 8
      %s345 = scalar_lea.vmem %s8, %s344
      %p346 = scmp.lt.s32.totalorder %s23, 1
      %s347 = scalar_select %p346, %s23, 1
      %p348 = scmp.lt.s32.totalorder %s24, 0
      %s349 = scalar_select %p348, %s24, 0
      %s350 = smul.addr %s347, 9
      %s351 = sadd.s32 %s349, %s350
      %s352 = smul.addr %s351, 8
      %s353 = scalar_lea.vmem %s0, %s352
      %p354 = scmp.lt.s32.totalorder %s23, 1
      %s355 = scalar_select %p354, %s23, 1
      %p356 = scmp.lt.s32.totalorder %s24, 0
      %s357 = scalar_select %p356, %s24, 0
      %s358 = smul.addr %s357, 9
      %s359 = smul.addr %s355, 9
      %s360 = sadd.s32 %s358, %s359
      %s361 = smul.addr %s360, 8
      %s362 = scalar_lea.vmem %s1, %s361
      %p363 = scmp.lt.s32.totalorder %s23, 1
      %s364 = scalar_select %p363, %s23, 1
      %p365 = scmp.lt.s32.totalorder %s24, 0
      %s366 = scalar_select %p365, %s24, 0
      %s367 = smul.addr %s364, 9
      %s368 = sadd.s32 %s366, %s367
      %s369 = smul.addr %s368, 8
      %s370 = scalar_lea.vmem %s8, %s369
      %v371 = vld [vmem:[%s353] sm:$0xff]
      %v372 = vld [vmem:[%s353 + $0x8] sm:$0xff]
      %v373 = vld [vmem:[%s353 + $0x10] sm:$0xff]
      %v374 = vld [vmem:[%s353 + $0x18] sm:$0xff]
      %v375 = vld [vmem:[%s353 + $0x20] sm:$0xff]
      %v376 = vld [vmem:[%s353 + $0x28] sm:$0xff]
      %v377 = vld [vmem:[%s353 + $0x30] sm:$0xff]
      %v378 = vld [vmem:[%s353 + $0x38] sm:$0xff]
      %v379 = vld [vmem:[%s353 + $0x40] sm:$0xff]
      %s380 = smul.u32 %s24, 16
      %v381 = vlaneseq
      %v382 = vand.u32 %v381, 127
      %v383 = vstv %s380
      %v384 = vadd.s32 %v383, %v382
      %vm385 = vcmp.lt.s32.totalorder %v384, 16
      %v386 = vsel %vm385, %v371, 0.0
      %v387 = vsel %vm385, %v372, 0.0
      %v388 = vsel %vm385, %v373, 0.0
      %v389 = vsel %vm385, %v374, 0.0
      %v390 = vsel %vm385, %v375, 0.0
      %v391 = vsel %vm385, %v376, 0.0
      %v392 = vsel %vm385, %v377, 0.0
      %v393 = vsel %vm385, %v378, 0.0
      %v394 = vsel %vm385, %v379, 0.0
      %v395 = vmul.f32 %v386, 0.5
      %v396 = vmul.f32 %v387, 0.5
      %v397 = vmul.f32 %v388, 0.5
      %v398 = vmul.f32 %v389, 0.5
      %v399 = vmul.f32 %v390, 0.5
      %v400 = vmul.f32 %v391, 0.5
      %v401 = vmul.f32 %v392, 0.5
      %v402 = vmul.f32 %v393, 0.5
      %v403 = vmul.f32 %v394, 0.5
      %v404 = vmul.f32 %v386, 0.70710677
      %v405 = vmul.f32 %v387, 0.70710677
      %v406 = vmul.f32 %v388, 0.70710677
      %v407 = vmul.f32 %v389, 0.70710677
      %v408 = vmul.f32 %v390, 0.70710677
      %v409 = vmul.f32 %v391, 0.70710677
      %v410 = vmul.f32 %v392, 0.70710677
      %v411 = vmul.f32 %v393, 0.70710677
      %v412 = vmul.f32 %v394, 0.70710677
      %v413 = vand.u32 2147483647, %v404
      %v414 = vand.u32 2147483647, %v405
      %v415 = vand.u32 2147483647, %v406
      %v416 = vand.u32 2147483647, %v407
      %v417 = vand.u32 2147483647, %v408
      %v418 = vand.u32 2147483647, %v409
      %v419 = vand.u32 2147483647, %v410
      %v420 = vand.u32 2147483647, %v411
      %v421 = vand.u32 2147483647, %v412
      %v422 = vmul.f32 %v413, 0.3275911
      %v423 = vmul.f32 %v414, 0.3275911
      %v424 = vmul.f32 %v415, 0.3275911
      %v425 = vmul.f32 %v416, 0.3275911
      %v426 = vmul.f32 %v417, 0.3275911
      %v427 = vmul.f32 %v418, 0.3275911
      %v428 = vmul.f32 %v419, 0.3275911
      %v429 = vmul.f32 %v420, 0.3275911
      %v430 = vmul.f32 %v421, 0.3275911
      %v431 = vadd.f32 %v422, 1.0
      %v432 = vadd.f32 %v423, 1.0
      %v433 = vadd.f32 %v424, 1.0
      %v434 = vadd.f32 %v425, 1.0
      %v435 = vadd.f32 %v426, 1.0
      %v436 = vadd.f32 %v427, 1.0
      %v437 = vadd.f32 %v428, 1.0
      %v438 = vadd.f32 %v429, 1.0
      %v439 = vadd.f32 %v430, 1.0
      %v440 = vrcp.pop %v431
      %v441 = vrcp.pop %v432
      %v442 = vrcp.pop %v433
      %v443 = vrcp.pop %v434
      %v444 = vrcp.pop %v435
      %v445 = vrcp.pop %v436
      %v446 = vrcp.pop %v437
      %v447 = vrcp.pop %v438
      %v448 = vrcp.pop %v439
      %v449 = vmul.f32 %v431, %v440
      %v450 = vmul.f32 %v432, %v441
      %v451 = vmul.f32 %v433, %v442
      %v452 = vmul.f32 %v434, %v443
      %v453 = vmul.f32 %v435, %v444
      %v454 = vmul.f32 %v436, %v445
      %v455 = vmul.f32 %v437, %v446
      %v456 = vmul.f32 %v438, %v447
      %v457 = vmul.f32 %v439, %v448
      %v458 = vsub.f32 2.0, %v449
      %v459 = vsub.f32 2.0, %v450
      %v460 = vsub.f32 2.0, %v451
      %v461 = vsub.f32 2.0, %v452
      %v462 = vsub.f32 2.0, %v453
      %v463 = vsub.f32 2.0, %v454
      %v464 = vsub.f32 2.0, %v455
      %v465 = vsub.f32 2.0, %v456
      %v466 = vsub.f32 2.0, %v457
      %v467 = vmul.f32 %v440, %v458
      %v468 = vmul.f32 %v441, %v459
      %v469 = vmul.f32 %v442, %v460
      %v470 = vmul.f32 %v443, %v461
      %v471 = vmul.f32 %v444, %v462
      %v472 = vmul.f32 %v445, %v463
      %v473 = vmul.f32 %v446, %v464
      %v474 = vmul.f32 %v447, %v465
      %v475 = vmul.f32 %v448, %v466
      %v476 = vmul.f32 %v467, 1.0614054
      %v477 = vmul.f32 %v468, 1.0614054
      %v478 = vmul.f32 %v469, 1.0614054
      %v479 = vmul.f32 %v470, 1.0614054
      %v480 = vmul.f32 %v471, 1.0614054
      %v481 = vmul.f32 %v472, 1.0614054
      %v482 = vmul.f32 %v473, 1.0614054
      %v483 = vmul.f32 %v474, 1.0614054
      %v484 = vmul.f32 %v475, 1.0614054
      %v485 = vadd.f32 %v476, -1.4531521
      %v486 = vadd.f32 %v477, -1.4531521
      %v487 = vadd.f32 %v478, -1.4531521
      %v488 = vadd.f32 %v479, -1.4531521
      %v489 = vadd.f32 %v480, -1.4531521
      %v490 = vadd.f32 %v481, -1.4531521
      %v491 = vadd.f32 %v482, -1.4531521
      %v492 = vadd.f32 %v483, -1.4531521
      %v493 = vadd.f32 %v484, -1.4531521
      %v494 = vmul.f32 %v485, %v467
      %v495 = vmul.f32 %v486, %v468
      %v496 = vmul.f32 %v487, %v469
      %v497 = vmul.f32 %v488, %v470
      %v498 = vmul.f32 %v489, %v471
      %v499 = vmul.f32 %v490, %v472
      %v500 = vmul.f32 %v491, %v473
      %v501 = vmul.f32 %v492, %v474
      %v502 = vmul.f32 %v493, %v475
      %v503 = vadd.f32 %v494, 1.4214138
      %v504 = vadd.f32 %v495, 1.4214138
      %v505 = vadd.f32 %v496, 1.4214138
      %v506 = vadd.f32 %v497, 1.4214138
      %v507 = vadd.f32 %v498, 1.4214138
      %v508 = vadd.f32 %v499, 1.4214138
      %v509 = vadd.f32 %v500, 1.4214138
      %v510 = vadd.f32 %v501, 1.4214138
      %v511 = vadd.f32 %v502, 1.4214138
      %v512 = vmul.f32 %v503, %v467
      %v513 = vmul.f32 %v504, %v468
      %v514 = vmul.f32 %v505, %v469
      %v515 = vmul.f32 %v506, %v470
      %v516 = vmul.f32 %v507, %v471
      %v517 = vmul.f32 %v508, %v472
      %v518 = vmul.f32 %v509, %v473
      %v519 = vmul.f32 %v510, %v474
      %v520 = vmul.f32 %v511, %v475
      %v521 = vadd.f32 %v512, -0.28449672
      %v522 = vadd.f32 %v513, -0.28449672
      %v523 = vadd.f32 %v514, -0.28449672
      %v524 = vadd.f32 %v515, -0.28449672
      %v525 = vadd.f32 %v516, -0.28449672
      %v526 = vadd.f32 %v517, -0.28449672
      %v527 = vadd.f32 %v518, -0.28449672
      %v528 = vadd.f32 %v519, -0.28449672
      %v529 = vadd.f32 %v520, -0.28449672
      %v530 = vmul.f32 %v521, %v467
      %v531 = vmul.f32 %v522, %v468
      %v532 = vmul.f32 %v523, %v469
      %v533 = vmul.f32 %v524, %v470
      %v534 = vmul.f32 %v525, %v471
      %v535 = vmul.f32 %v526, %v472
      %v536 = vmul.f32 %v527, %v473
      %v537 = vmul.f32 %v528, %v474
      %v538 = vmul.f32 %v529, %v475
      %v539 = vadd.f32 %v530, 0.2548296
      %v540 = vadd.f32 %v531, 0.2548296
      %v541 = vadd.f32 %v532, 0.2548296
      %v542 = vadd.f32 %v533, 0.2548296
      %v543 = vadd.f32 %v534, 0.2548296
      %v544 = vadd.f32 %v535, 0.2548296
      %v545 = vadd.f32 %v536, 0.2548296
      %v546 = vadd.f32 %v537, 0.2548296
      %v547 = vadd.f32 %v538, 0.2548296
      %v548 = vmul.f32 %v539, %v467
      %v549 = vmul.f32 %v540, %v468
      %v550 = vmul.f32 %v541, %v469
      %v551 = vmul.f32 %v542, %v470
      %v552 = vmul.f32 %v543, %v471
      %v553 = vmul.f32 %v544, %v472
      %v554 = vmul.f32 %v545, %v473
      %v555 = vmul.f32 %v546, %v474
      %v556 = vmul.f32 %v547, %v475
      %v557 = vsub.f32 0.0, %v413
      %v558 = vsub.f32 0.0, %v414
      %v559 = vsub.f32 0.0, %v415
      %v560 = vsub.f32 0.0, %v416
      %v561 = vsub.f32 0.0, %v417
      %v562 = vsub.f32 0.0, %v418
      %v563 = vsub.f32 0.0, %v419
      %v564 = vsub.f32 0.0, %v420
      %v565 = vsub.f32 0.0, %v421
      %v566 = vmul.f32 %v557, %v413
      %v567 = vmul.f32 %v558, %v414
      %v568 = vmul.f32 %v559, %v415
      %v569 = vmul.f32 %v560, %v416
      %v570 = vmul.f32 %v561, %v417
      %v571 = vmul.f32 %v562, %v418
      %v572 = vmul.f32 %v563, %v419
      %v573 = vmul.f32 %v564, %v420
      %v574 = vmul.f32 %v565, %v421
      %v575 = vmul.f32 %v566, 1.442695
      %v576 = vpow.pop %v575
      %v577 = vmul.f32 %v567, 1.442695
      %v578 = vpow.pop %v577
      %v579 = vmul.f32 %v568, 1.442695
      %v580 = vpow.pop %v579
      %v581 = vmul.f32 %v569, 1.442695
      %v582 = vpow.pop %v581
      %v583 = vmul.f32 %v570, 1.442695
      %v584 = vpow.pop %v583
      %v585 = vmul.f32 %v571, 1.442695
      %v586 = vpow.pop %v585
      %v587 = vmul.f32 %v572, 1.442695
      %v588 = vpow.pop %v587
      %v589 = vmul.f32 %v573, 1.442695
      %v590 = vpow.pop %v589
      %v591 = vmul.f32 %v574, 1.442695
      %v592 = vpow.pop %v591
      %v593 = vmul.f32 %v548, %v576
      %v594 = vmul.f32 %v549, %v578
      %v595 = vmul.f32 %v550, %v580
      %v596 = vmul.f32 %v551, %v582
      %v597 = vmul.f32 %v552, %v584
      %v598 = vmul.f32 %v553, %v586
      %v599 = vmul.f32 %v554, %v588
      %v600 = vmul.f32 %v555, %v590
      %v601 = vmul.f32 %v556, %v592
      %v602 = vsub.f32 1.0, %v593
      %v603 = vsub.f32 1.0, %v594
      %v604 = vsub.f32 1.0, %v595
      %v605 = vsub.f32 1.0, %v596
      %v606 = vsub.f32 1.0, %v597
      %v607 = vsub.f32 1.0, %v598
      %v608 = vsub.f32 1.0, %v599
      %v609 = vsub.f32 1.0, %v600
      %v610 = vsub.f32 1.0, %v601
      %vm611 = vcmp.ge.f32.partialorder %v404, 0.0
      %vm612 = vcmp.ge.f32.partialorder %v405, 0.0
      %vm613 = vcmp.ge.f32.partialorder %v406, 0.0
      %vm614 = vcmp.ge.f32.partialorder %v407, 0.0
      %vm615 = vcmp.ge.f32.partialorder %v408, 0.0
      %vm616 = vcmp.ge.f32.partialorder %v409, 0.0
      %vm617 = vcmp.ge.f32.partialorder %v410, 0.0
      %vm618 = vcmp.ge.f32.partialorder %v411, 0.0
      %vm619 = vcmp.ge.f32.partialorder %v412, 0.0
      %v620 = vsub.f32 0.0, %v602
      %v621 = vsub.f32 0.0, %v603
      %v622 = vsub.f32 0.0, %v604
      %v623 = vsub.f32 0.0, %v605
      %v624 = vsub.f32 0.0, %v606
      %v625 = vsub.f32 0.0, %v607
      %v626 = vsub.f32 0.0, %v608
      %v627 = vsub.f32 0.0, %v609
      %v628 = vsub.f32 0.0, %v610
      %v629 = vsel %vm611, %v602, %v620
      %v630 = vsel %vm612, %v603, %v621
      %v631 = vsel %vm613, %v604, %v622
      %v632 = vsel %vm614, %v605, %v623
      %v633 = vsel %vm615, %v606, %v624
      %v634 = vsel %vm616, %v607, %v625
      %v635 = vsel %vm617, %v608, %v626
      %v636 = vsel %vm618, %v609, %v627
      %v637 = vsel %vm619, %v610, %v628
      %v638 = vadd.f32 %v629, 1.0
      %v639 = vadd.f32 %v630, 1.0
      %v640 = vadd.f32 %v631, 1.0
      %v641 = vadd.f32 %v632, 1.0
      %v642 = vadd.f32 %v633, 1.0
      %v643 = vadd.f32 %v634, 1.0
      %v644 = vadd.f32 %v635, 1.0
      %v645 = vadd.f32 %v636, 1.0
      %v646 = vadd.f32 %v637, 1.0
      %v647 = vmul.f32 %v395, %v638
      %v648 = vmul.f32 %v396, %v639
      %v649 = vmul.f32 %v397, %v640
      %v650 = vmul.f32 %v398, %v641
      %v651 = vmul.f32 %v399, %v642
      %v652 = vmul.f32 %v400, %v643
      %v653 = vmul.f32 %v401, %v644
      %v654 = vmul.f32 %v402, %v645
      %v655 = vmul.f32 %v403, %v646
      %665 = vrot.lane.b32.xlu0 %v647, 1
      %v666 = vpop.permute.xlu0 %665
      %667 = vrot.lane.b32.xlu0 %v648, 1
      %v668 = vpop.permute.xlu0 %667
      %669 = vrot.lane.b32.xlu0 %v649, 1
      %v670 = vpop.permute.xlu0 %669
      %671 = vrot.lane.b32.xlu0 %v650, 1
      %v672 = vpop.permute.xlu0 %671
      %673 = vrot.lane.b32.xlu0 %v651, 1
      %v674 = vpop.permute.xlu0 %673
      %675 = vrot.lane.b32.xlu0 %v652, 1
      %v676 = vpop.permute.xlu0 %675
      %677 = vrot.lane.b32.xlu0 %v653, 1
      %v678 = vpop.permute.xlu0 %677
      %679 = vrot.lane.b32.xlu0 %v654, 1
      %v680 = vpop.permute.xlu0 %679
      %681 = vrot.lane.b32.xlu0 %v655, 1
      %v682 = vpop.permute.xlu0 %681
      %vm692 = vcmask 138248
      %693 = vst.msk [vmem:[#allocation2] sm:$0xff] %vm692, %v666
      %694 = vst.msk [vmem:[#allocation2 + $0x8] sm:$0xff] %vm692, %v668
      %695 = vst.msk [vmem:[#allocation2 + $0x10] sm:$0xff] %vm692, %v670
      %696 = vst.msk [vmem:[#allocation2 + $0x18] sm:$0xff] %vm692, %v672
      %697 = vst.msk [vmem:[#allocation2 + $0x20] sm:$0xff] %vm692, %v674
      %698 = vst.msk [vmem:[#allocation2 + $0x28] sm:$0xff] %vm692, %v676
      %699 = vst.msk [vmem:[#allocation2 + $0x30] sm:$0xff] %vm692, %v678
      %700 = vst.msk [vmem:[#allocation2 + $0x38] sm:$0xff] %vm692, %v680
      %701 = vst.msk [vmem:[#allocation2 + $0x40] sm:$0xff] %vm692, %v682
      %v702 = vld [vmem:[%s362] sm:$0xff]
      %v703 = vld [vmem:[%s362 + $0x8] sm:$0xff]
      %v704 = vld [vmem:[%s362 + $0x10] sm:$0xff]
      %v705 = vld [vmem:[%s362 + $0x18] sm:$0xff]
      %v706 = vld [vmem:[%s362 + $0x20] sm:$0xff]
      %v707 = vld [vmem:[%s362 + $0x28] sm:$0xff]
      %v708 = vld [vmem:[%s362 + $0x30] sm:$0xff]
      %v709 = vld [vmem:[%s362 + $0x38] sm:$0xff]
      %v710 = vld [vmem:[%s362 + $0x40] sm:$0xff]
      %v711 = vmul.f32 %v702, 0.5
      %v712 = vmul.f32 %v703, 0.5
      %v713 = vmul.f32 %v704, 0.5
      %v714 = vmul.f32 %v705, 0.5
      %v715 = vmul.f32 %v706, 0.5
      %v716 = vmul.f32 %v707, 0.5
      %v717 = vmul.f32 %v708, 0.5
      %v718 = vmul.f32 %v709, 0.5
      %v719 = vmul.f32 %v710, 0.5
      %v720 = vmul.f32 %v702, 0.70710677
      %v721 = vmul.f32 %v703, 0.70710677
      %v722 = vmul.f32 %v704, 0.70710677
      %v723 = vmul.f32 %v705, 0.70710677
      %v724 = vmul.f32 %v706, 0.70710677
      %v725 = vmul.f32 %v707, 0.70710677
      %v726 = vmul.f32 %v708, 0.70710677
      %v727 = vmul.f32 %v709, 0.70710677
      %v728 = vmul.f32 %v710, 0.70710677
      %v729 = vand.u32 2147483647, %v720
      %v730 = vand.u32 2147483647, %v721
      %v731 = vand.u32 2147483647, %v722
      %v732 = vand.u32 2147483647, %v723
      %v733 = vand.u32 2147483647, %v724
      %v734 = vand.u32 2147483647, %v725
      %v735 = vand.u32 2147483647, %v726
      %v736 = vand.u32 2147483647, %v727
      %v737 = vand.u32 2147483647, %v728
      %v738 = vmul.f32 %v729, 0.3275911
      %v739 = vmul.f32 %v730, 0.3275911
      %v740 = vmul.f32 %v731, 0.3275911
      %v741 = vmul.f32 %v732, 0.3275911
      %v742 = vmul.f32 %v733, 0.3275911
      %v743 = vmul.f32 %v734, 0.3275911
      %v744 = vmul.f32 %v735, 0.3275911
      %v745 = vmul.f32 %v736, 0.3275911
      %v746 = vmul.f32 %v737, 0.3275911
      %v747 = vadd.f32 %v738, 1.0
      %v748 = vadd.f32 %v739, 1.0
      %v749 = vadd.f32 %v740, 1.0
      %v750 = vadd.f32 %v741, 1.0
      %v751 = vadd.f32 %v742, 1.0
      %v752 = vadd.f32 %v743, 1.0
      %v753 = vadd.f32 %v744, 1.0
      %v754 = vadd.f32 %v745, 1.0
      %v755 = vadd.f32 %v746, 1.0
      %v756 = vrcp.pop %v747
      %v757 = vrcp.pop %v748
      %v758 = vrcp.pop %v749
      %v759 = vrcp.pop %v750
      %v760 = vrcp.pop %v751
      %v761 = vrcp.pop %v752
      %v762 = vrcp.pop %v753
      %v763 = vrcp.pop %v754
      %v764 = vrcp.pop %v755
      %v765 = vmul.f32 %v747, %v756
      %v766 = vmul.f32 %v748, %v757
      %v767 = vmul.f32 %v749, %v758
      %v768 = vmul.f32 %v750, %v759
      %v769 = vmul.f32 %v751, %v760
      %v770 = vmul.f32 %v752, %v761
      %v771 = vmul.f32 %v753, %v762
      %v772 = vmul.f32 %v754, %v763
      %v773 = vmul.f32 %v755, %v764
      %v774 = vsub.f32 2.0, %v765
      %v775 = vsub.f32 2.0, %v766
      %v776 = vsub.f32 2.0, %v767
      %v777 = vsub.f32 2.0, %v768
      %v778 = vsub.f32 2.0, %v769
      %v779 = vsub.f32 2.0, %v770
      %v780 = vsub.f32 2.0, %v771
      %v781 = vsub.f32 2.0, %v772
      %v782 = vsub.f32 2.0, %v773
      %v783 = vmul.f32 %v756, %v774
      %v784 = vmul.f32 %v757, %v775
      %v785 = vmul.f32 %v758, %v776
      %v786 = vmul.f32 %v759, %v777
      %v787 = vmul.f32 %v760, %v778
      %v788 = vmul.f32 %v761, %v779
      %v789 = vmul.f32 %v762, %v780
      %v790 = vmul.f32 %v763, %v781
      %v791 = vmul.f32 %v764, %v782
      %v792 = vmul.f32 %v783, 1.0614054
      %v793 = vmul.f32 %v784, 1.0614054
      %v794 = vmul.f32 %v785, 1.0614054
      %v795 = vmul.f32 %v786, 1.0614054
      %v796 = vmul.f32 %v787, 1.0614054
      %v797 = vmul.f32 %v788, 1.0614054
      %v798 = vmul.f32 %v789, 1.0614054
      %v799 = vmul.f32 %v790, 1.0614054
      %v800 = vmul.f32 %v791, 1.0614054
      %v801 = vadd.f32 %v792, -1.4531521
      %v802 = vadd.f32 %v793, -1.4531521
      %v803 = vadd.f32 %v794, -1.4531521
      %v804 = vadd.f32 %v795, -1.4531521
      %v805 = vadd.f32 %v796, -1.4531521
      %v806 = vadd.f32 %v797, -1.4531521
      %v807 = vadd.f32 %v798, -1.4531521
      %v808 = vadd.f32 %v799, -1.4531521
      %v809 = vadd.f32 %v800, -1.4531521
      %v810 = vmul.f32 %v801, %v783
      %v811 = vmul.f32 %v802, %v784
      %v812 = vmul.f32 %v803, %v785
      %v813 = vmul.f32 %v804, %v786
      %v814 = vmul.f32 %v805, %v787
      %v815 = vmul.f32 %v806, %v788
      %v816 = vmul.f32 %v807, %v789
      %v817 = vmul.f32 %v808, %v790
      %v818 = vmul.f32 %v809, %v791
      %v819 = vadd.f32 %v810, 1.4214138
      %v820 = vadd.f32 %v811, 1.4214138
      %v821 = vadd.f32 %v812, 1.4214138
      %v822 = vadd.f32 %v813, 1.4214138
      %v823 = vadd.f32 %v814, 1.4214138
      %v824 = vadd.f32 %v815, 1.4214138
      %v825 = vadd.f32 %v816, 1.4214138
      %v826 = vadd.f32 %v817, 1.4214138
      %v827 = vadd.f32 %v818, 1.4214138
      %v828 = vmul.f32 %v819, %v783
      %v829 = vmul.f32 %v820, %v784
      %v830 = vmul.f32 %v821, %v785
      %v831 = vmul.f32 %v822, %v786
      %v832 = vmul.f32 %v823, %v787
      %v833 = vmul.f32 %v824, %v788
      %v834 = vmul.f32 %v825, %v789
      %v835 = vmul.f32 %v826, %v790
      %v836 = vmul.f32 %v827, %v791
      %v837 = vadd.f32 %v828, -0.28449672
      %v838 = vadd.f32 %v829, -0.28449672
      %v839 = vadd.f32 %v830, -0.28449672
      %v840 = vadd.f32 %v831, -0.28449672
      %v841 = vadd.f32 %v832, -0.28449672
      %v842 = vadd.f32 %v833, -0.28449672
      %v843 = vadd.f32 %v834, -0.28449672
      %v844 = vadd.f32 %v835, -0.28449672
      %v845 = vadd.f32 %v836, -0.28449672
      %v846 = vmul.f32 %v837, %v783
      %v847 = vmul.f32 %v838, %v784
      %v848 = vmul.f32 %v839, %v785
      %v849 = vmul.f32 %v840, %v786
      %v850 = vmul.f32 %v841, %v787
      %v851 = vmul.f32 %v842, %v788
      %v852 = vmul.f32 %v843, %v789
      %v853 = vmul.f32 %v844, %v790
      %v854 = vmul.f32 %v845, %v791
      %v855 = vadd.f32 %v846, 0.2548296
      %v856 = vadd.f32 %v847, 0.2548296
      %v857 = vadd.f32 %v848, 0.2548296
      %v858 = vadd.f32 %v849, 0.2548296
      %v859 = vadd.f32 %v850, 0.2548296
      %v860 = vadd.f32 %v851, 0.2548296
      %v861 = vadd.f32 %v852, 0.2548296
      %v862 = vadd.f32 %v853, 0.2548296
      %v863 = vadd.f32 %v854, 0.2548296
      %v864 = vmul.f32 %v855, %v783
      %v865 = vmul.f32 %v856, %v784
      %v866 = vmul.f32 %v857, %v785
      %v867 = vmul.f32 %v858, %v786
      %v868 = vmul.f32 %v859, %v787
      %v869 = vmul.f32 %v860, %v788
      %v870 = vmul.f32 %v861, %v789
      %v871 = vmul.f32 %v862, %v790
      %v872 = vmul.f32 %v863, %v791
      %v873 = vsub.f32 0.0, %v729
      %v874 = vsub.f32 0.0, %v730
      %v875 = vsub.f32 0.0, %v731
      %v876 = vsub.f32 0.0, %v732
      %v877 = vsub.f32 0.0, %v733
      %v878 = vsub.f32 0.0, %v734
      %v879 = vsub.f32 0.0, %v735
      %v880 = vsub.f32 0.0, %v736
      %v881 = vsub.f32 0.0, %v737
      %v882 = vmul.f32 %v873, %v729
      %v883 = vmul.f32 %v874, %v730
      %v884 = vmul.f32 %v875, %v731
      %v885 = vmul.f32 %v876, %v732
      %v886 = vmul.f32 %v877, %v733
      %v887 = vmul.f32 %v878, %v734
      %v888 = vmul.f32 %v879, %v735
      %v889 = vmul.f32 %v880, %v736
      %v890 = vmul.f32 %v881, %v737
      %v891 = vmul.f32 %v882, 1.442695
      %v892 = vpow.pop %v891
      %v893 = vmul.f32 %v883, 1.442695
      %v894 = vpow.pop %v893
      %v895 = vmul.f32 %v884, 1.442695
      %v896 = vpow.pop %v895
      %v897 = vmul.f32 %v885, 1.442695
      %v898 = vpow.pop %v897
      %v899 = vmul.f32 %v886, 1.442695
      %v900 = vpow.pop %v899
      %v901 = vmul.f32 %v887, 1.442695
      %v902 = vpow.pop %v901
      %v903 = vmul.f32 %v888, 1.442695
      %v904 = vpow.pop %v903
      %v905 = vmul.f32 %v889, 1.442695
      %v906 = vpow.pop %v905
      %v907 = vmul.f32 %v890, 1.442695
      %v908 = vpow.pop %v907
      %v909 = vmul.f32 %v864, %v892
      %v910 = vmul.f32 %v865, %v894
      %v911 = vmul.f32 %v866, %v896
      %v912 = vmul.f32 %v867, %v898
      %v913 = vmul.f32 %v868, %v900
      %v914 = vmul.f32 %v869, %v902
      %v915 = vmul.f32 %v870, %v904
      %v916 = vmul.f32 %v871, %v906
      %v917 = vmul.f32 %v872, %v908
      %v918 = vsub.f32 1.0, %v909
      %v919 = vsub.f32 1.0, %v910
      %v920 = vsub.f32 1.0, %v911
      %v921 = vsub.f32 1.0, %v912
      %v922 = vsub.f32 1.0, %v913
      %v923 = vsub.f32 1.0, %v914
      %v924 = vsub.f32 1.0, %v915
      %v925 = vsub.f32 1.0, %v916
      %v926 = vsub.f32 1.0, %v917
      %vm927 = vcmp.ge.f32.partialorder %v720, 0.0
      %vm928 = vcmp.ge.f32.partialorder %v721, 0.0
      %vm929 = vcmp.ge.f32.partialorder %v722, 0.0
      %vm930 = vcmp.ge.f32.partialorder %v723, 0.0
      %vm931 = vcmp.ge.f32.partialorder %v724, 0.0
      %vm932 = vcmp.ge.f32.partialorder %v725, 0.0
      %vm933 = vcmp.ge.f32.partialorder %v726, 0.0
      %vm934 = vcmp.ge.f32.partialorder %v727, 0.0
      %vm935 = vcmp.ge.f32.partialorder %v728, 0.0
      %v936 = vsub.f32 0.0, %v918
      %v937 = vsub.f32 0.0, %v919
      %v938 = vsub.f32 0.0, %v920
      %v939 = vsub.f32 0.0, %v921
      %v940 = vsub.f32 0.0, %v922
      %v941 = vsub.f32 0.0, %v923
      %v942 = vsub.f32 0.0, %v924
      %v943 = vsub.f32 0.0, %v925
      %v944 = vsub.f32 0.0, %v926
      %v945 = vsel %vm927, %v918, %v936
      %v946 = vsel %vm928, %v919, %v937
      %v947 = vsel %vm929, %v920, %v938
      %v948 = vsel %vm930, %v921, %v939
      %v949 = vsel %vm931, %v922, %v940
      %v950 = vsel %vm932, %v923, %v941
      %v951 = vsel %vm933, %v924, %v942
      %v952 = vsel %vm934, %v925, %v943
      %v953 = vsel %vm935, %v926, %v944
      %v954 = vadd.f32 %v945, 1.0
      %v955 = vadd.f32 %v946, 1.0
      %v956 = vadd.f32 %v947, 1.0
      %v957 = vadd.f32 %v948, 1.0
      %v958 = vadd.f32 %v949, 1.0
      %v959 = vadd.f32 %v950, 1.0
      %v960 = vadd.f32 %v951, 1.0
      %v961 = vadd.f32 %v952, 1.0
      %v962 = vadd.f32 %v953, 1.0
      %v963 = vmul.f32 %v711, %v954
      %v964 = vmul.f32 %v712, %v955
      %v965 = vmul.f32 %v713, %v956
      %v966 = vmul.f32 %v714, %v957
      %v967 = vmul.f32 %v715, %v958
      %v968 = vmul.f32 %v716, %v959
      %v969 = vmul.f32 %v717, %v960
      %v970 = vmul.f32 %v718, %v961
      %v971 = vmul.f32 %v719, %v962
      %vm972 = vcmask 7168
      %973 = vst.msk [vmem:[#allocation2] sm:$0xff] %vm972, %v963
      %974 = vst.msk [vmem:[#allocation2 + $0x8] sm:$0xff] %vm972, %v964
      %975 = vst.msk [vmem:[#allocation2 + $0x10] sm:$0xff] %vm972, %v965
      %976 = vst.msk [vmem:[#allocation2 + $0x18] sm:$0xff] %vm972, %v966
      %977 = vst.msk [vmem:[#allocation2 + $0x20] sm:$0xff] %vm972, %v967
      %978 = vst.msk [vmem:[#allocation2 + $0x28] sm:$0xff] %vm972, %v968
      %979 = vst.msk [vmem:[#allocation2 + $0x30] sm:$0xff] %vm972, %v969
      %980 = vst.msk [vmem:[#allocation2 + $0x38] sm:$0xff] %vm972, %v970
      %981 = vst.msk [vmem:[#allocation2 + $0x40] sm:$0xff] %vm972, %v971
      %991 = vrot.lane.b32.xlu0 %v963, 16
      %v992 = vpop.permute.xlu0 %991
      %993 = vrot.lane.b32.xlu0 %v964, 16
      %v994 = vpop.permute.xlu0 %993
      %995 = vrot.lane.b32.xlu0 %v965, 16
      %v996 = vpop.permute.xlu0 %995
      %997 = vrot.lane.b32.xlu0 %v966, 16
      %v998 = vpop.permute.xlu0 %997
      %999 = vrot.lane.b32.xlu0 %v967, 16
      %v1000 = vpop.permute.xlu0 %999
      %1001 = vrot.lane.b32.xlu0 %v968, 16
      %v1002 = vpop.permute.xlu0 %1001
      %1003 = vrot.lane.b32.xlu0 %v969, 16
      %v1004 = vpop.permute.xlu0 %1003
      %1005 = vrot.lane.b32.xlu0 %v970, 16
      %v1006 = vpop.permute.xlu0 %1005
      %1007 = vrot.lane.b32.xlu0 %v971, 16
      %v1008 = vpop.permute.xlu0 %1007
      %vm1018 = vcmask 146568
      %1019 = vst.msk [vmem:[#allocation2] sm:$0xff] %vm1018, %v992
      %1020 = vst.msk [vmem:[#allocation2 + $0x8] sm:$0xff] %vm1018, %v994
      %1021 = vst.msk [vmem:[#allocation2 + $0x10] sm:$0xff] %vm1018, %v996
      %1022 = vst.msk [vmem:[#allocation2 + $0x18] sm:$0xff] %vm1018, %v998
      %1023 = vst.msk [vmem:[#allocation2 + $0x20] sm:$0xff] %vm1018, %v1000
      %1024 = vst.msk [vmem:[#allocation2 + $0x28] sm:$0xff] %vm1018, %v1002
      %1025 = vst.msk [vmem:[#allocation2 + $0x30] sm:$0xff] %vm1018, %v1004
      %1026 = vst.msk [vmem:[#allocation2 + $0x38] sm:$0xff] %vm1018, %v1006
      %1027 = vst.msk [vmem:[#allocation2 + $0x40] sm:$0xff] %vm1018, %v1008
      %v1028 = vld [vmem:[%s2] sm:$0xff]
      %v1029 = vld [vmem:[%s2 + $0x8] sm:$0xff]
      %v1030 = vld [vmem:[%s2 + $0x10] sm:$0xff]
      %v1031 = vld [vmem:[%s2 + $0x18] sm:$0xff]
      %v1032 = vld [vmem:[#allocation2] sm:$0xff]
      %v1033 = vld [vmem:[#allocation2 + $0x8] sm:$0xff]
      %v1034 = vld [vmem:[#allocation2 + $0x10] sm:$0xff]
      %v1035 = vld [vmem:[#allocation2 + $0x18] sm:$0xff]
      %v1036 = vld [vmem:[#allocation2 + $0x20] sm:$0xff]
      %v1037 = vld [vmem:[#allocation2 + $0x28] sm:$0xff]
      %v1038 = vld [vmem:[#allocation2 + $0x30] sm:$0xff]
      %v1039 = vld [vmem:[#allocation2 + $0x38] sm:$0xff]
      %v1040 = vld [vmem:[#allocation2 + $0x40] sm:$0xff]
      %s1041 = scalar_lea.vmem %s2, 32
      %v1042 = vld [vmem:[%s1041] sm:$0xff]
      %v1043 = vld [vmem:[%s1041 + $0x8] sm:$0xff]
      %v1044 = vld [vmem:[%s1041 + $0x10] sm:$0xff]
      %v1045 = vld [vmem:[%s1041 + $0x18] sm:$0xff]
      %1055 = vrot.lane.b32.xlu0 %v1032, 127
      %v1056 = vpop.permute.xlu0 %1055
      %1057 = vrot.lane.b32.xlu0 %v1033, 127
      %v1058 = vpop.permute.xlu0 %1057
      %1059 = vrot.lane.b32.xlu0 %v1034, 127
      %v1060 = vpop.permute.xlu0 %1059
      %1061 = vrot.lane.b32.xlu0 %v1035, 127
      %v1062 = vpop.permute.xlu0 %1061
      %1063 = vrot.lane.b32.xlu0 %v1036, 127
      %v1064 = vpop.permute.xlu0 %1063
      %1065 = vrot.lane.b32.xlu0 %v1037, 127
      %v1066 = vpop.permute.xlu0 %1065
      %1067 = vrot.lane.b32.xlu0 %v1038, 127
      %v1068 = vpop.permute.xlu0 %1067
      %1069 = vrot.lane.b32.xlu0 %v1039, 127
      %v1070 = vpop.permute.xlu0 %1069
      %1071 = vrot.lane.b32.xlu0 %v1040, 127
      %v1072 = vpop.permute.xlu0 %1071
      %vm1082 = vcmask 588800
      %v1084 = vsel %vm1082, %v1042, 0
      %v1087 = vsel %vm1082, %v1043, 0
      %v1090 = vsel %vm1082, %v1044, 0
      %v1093 = vsel %vm1082, %v1045, 0
      %1095 = vmatpush.msra.mxu0 0.0
      %1096 = vmatpush.msra.mxu0 0.0
      %1097 = vmatpush.msra.mxu0 0.0
      %1098 = vmatpush.msra.mxu0 0.0
      %1099 = vmatpush.msra.mxu0 0.0
      %1100 = vmatpush.msra.mxu0 0.0
      %1101 = vmatpush.msra.mxu0 0.0
      %1102 = vmatpush.msra.mxu0 %v1072
      %1103 = vmatpush.msra.mxu0 %v1070
      %1104 = vmatpush.msra.mxu0 %v1068
      %1105 = vmatpush.msra.mxu0 %v1066
      %1106 = vmatpush.msra.mxu0 %v1064
      %1107 = vmatpush.msra.mxu0 %v1062
      %1108 = vmatpush.msra.mxu0 %v1060
      %1109 = vmatpush.msra.mxu0 %v1058
      %1110 = vmatpush.msra.mxu0 %v1056
      %1111 = vmatmul.f32.gmra.mxu0 %v1084
      %v1112 = vpop.f32.mrf.mxu0
      %v1113 = vadd.f32 0.0, %v1112
      %1114 = vmatmul.f32.gmra.mxu0 %v1087
      %v1115 = vpop.f32.mrf.mxu0
      %v1116 = vadd.f32 0.0, %v1115
      %1117 = vmatmul.f32.gmra.mxu0 %v1090
      %v1118 = vpop.f32.mrf.mxu0
      %v1119 = vadd.f32 0.0, %v1118
      %1120 = vmatmul.f32.gmra.mxu0 %v1093
      %v1121 = vpop.f32.mrf.mxu0
      %v1122 = vadd.f32 0.0, %v1121
      %1123 = vdwg.mxu0
      %v1125 = vsel %vm1082, %v1028, 0
      %v1128 = vsel %vm1082, %v1029, 0
      %v1131 = vsel %vm1082, %v1030, 0
      %v1134 = vsel %vm1082, %v1031, 0
      %1136 = vmatpush.msra.mxu0 0.0
      %1137 = vmatpush.msra.mxu0 0.0
      %1138 = vmatpush.msra.mxu0 0.0
      %1139 = vmatpush.msra.mxu0 0.0
      %1140 = vmatpush.msra.mxu0 0.0
      %1141 = vmatpush.msra.mxu0 0.0
      %1142 = vmatpush.msra.mxu0 0.0
      %1143 = vmatpush.msra.mxu0 %v1040
      %1144 = vmatpush.msra.mxu0 %v1039
      %1145 = vmatpush.msra.mxu0 %v1038
      %1146 = vmatpush.msra.mxu0 %v1037
      %1147 = vmatpush.msra.mxu0 %v1036
      %1148 = vmatpush.msra.mxu0 %v1035
      %1149 = vmatpush.msra.mxu0 %v1034
      %1150 = vmatpush.msra.mxu0 %v1033
      %1151 = vmatpush.msra.mxu0 %v1032
      %1152 = vmatmul.f32.gmra.mxu0 %v1125
      %v1153 = vpop.f32.mrf.mxu0
      %v1154 = vadd.f32 %v1113, %v1153
      %1155 = vmatmul.f32.gmra.mxu0 %v1128
      %v1156 = vpop.f32.mrf.mxu0
      %v1157 = vadd.f32 %v1116, %v1156
      %1158 = vmatmul.f32.gmra.mxu0 %v1131
      %v1159 = vpop.f32.mrf.mxu0
      %v1160 = vadd.f32 %v1119, %v1159
      %1161 = vmatmul.f32.gmra.mxu0 %v1134
      %v1162 = vpop.f32.mrf.mxu0
      %v1163 = vadd.f32 %v1122, %v1162
      %1164 = vdwg.mxu0
      %s1165 = scalar_lea.vmem %s2, 64
      %v1166 = vld [vmem:[%s1165] sm:$0xff]
      %v1167 = vld [vmem:[%s1165 + $0x8] sm:$0xff]
      %v1168 = vld [vmem:[%s1165 + $0x10] sm:$0xff]
      %v1169 = vld [vmem:[%s1165 + $0x18] sm:$0xff]
      %1170 = vrot.lane.b32.xlu0 %v1032, 126
      %v1171 = vpop.permute.xlu0 %1170
      %1172 = vrot.lane.b32.xlu0 %v1033, 126
      %v1173 = vpop.permute.xlu0 %1172
      %1174 = vrot.lane.b32.xlu0 %v1034, 126
      %v1175 = vpop.permute.xlu0 %1174
      %1176 = vrot.lane.b32.xlu0 %v1035, 126
      %v1177 = vpop.permute.xlu0 %1176
      %1178 = vrot.lane.b32.xlu0 %v1036, 126
      %v1179 = vpop.permute.xlu0 %1178
      %1180 = vrot.lane.b32.xlu0 %v1037, 126
      %v1181 = vpop.permute.xlu0 %1180
      %1182 = vrot.lane.b32.xlu0 %v1038, 126
      %v1183 = vpop.permute.xlu0 %1182
      %1184 = vrot.lane.b32.xlu0 %v1039, 126
      %v1185 = vpop.permute.xlu0 %1184
      %1186 = vrot.lane.b32.xlu0 %v1040, 126
      %v1187 = vpop.permute.xlu0 %1186
      %v1198 = vsel %vm1082, %v1166, 0
      %v1201 = vsel %vm1082, %v1167, 0
      %v1204 = vsel %vm1082, %v1168, 0
      %v1207 = vsel %vm1082, %v1169, 0
      %1209 = vmatpush.msra.mxu0 0.0
      %1210 = vmatpush.msra.mxu0 0.0
      %1211 = vmatpush.msra.mxu0 0.0
      %1212 = vmatpush.msra.mxu0 0.0
      %1213 = vmatpush.msra.mxu0 0.0
      %1214 = vmatpush.msra.mxu0 0.0
      %1215 = vmatpush.msra.mxu0 0.0
      %1216 = vmatpush.msra.mxu0 %v1187
      %1217 = vmatpush.msra.mxu0 %v1185
      %1218 = vmatpush.msra.mxu0 %v1183
      %1219 = vmatpush.msra.mxu0 %v1181
      %1220 = vmatpush.msra.mxu0 %v1179
      %1221 = vmatpush.msra.mxu0 %v1177
      %1222 = vmatpush.msra.mxu0 %v1175
      %1223 = vmatpush.msra.mxu0 %v1173
      %1224 = vmatpush.msra.mxu0 %v1171
      %1225 = vmatmul.f32.gmra.mxu0 %v1198
      %v1226 = vpop.f32.mrf.mxu0
      %v1227 = vadd.f32 0.0, %v1226
      %1228 = vmatmul.f32.gmra.mxu0 %v1201
      %v1229 = vpop.f32.mrf.mxu0
      %v1230 = vadd.f32 0.0, %v1229
      %1231 = vmatmul.f32.gmra.mxu0 %v1204
      %v1232 = vpop.f32.mrf.mxu0
      %v1233 = vadd.f32 0.0, %v1232
      %1234 = vmatmul.f32.gmra.mxu0 %v1207
      %v1235 = vpop.f32.mrf.mxu0
      %v1236 = vadd.f32 0.0, %v1235
      %1237 = vdwg.mxu0
      %v1238 = vadd.f32 %v1154, %v1227
      %v1239 = vadd.f32 %v1157, %v1230
      %v1240 = vadd.f32 %v1160, %v1233
      %v1241 = vadd.f32 %v1163, %v1236
      %v1242 = vld [vmem:[%s4] sm:$0xff]
      %v1243 = vld [vmem:[%s4 + $0x8] sm:$0xff]
      %v1244 = vld [vmem:[%s4 + $0x10] sm:$0xff]
      %v1245 = vld [vmem:[%s4 + $0x18] sm:$0xff]
      %1247 = vset.pattern.permute.xlu0 0
      %1248 = vperm.xlu0 %1247, %v1242
      %v1249 = vpop.permute.xlu0 %1248
      %1252 = vset.pattern.permute.xlu0 0
      %1253 = vperm.xlu0 %1252, %v1243
      %v1254 = vpop.permute.xlu0 %1253
      %1257 = vset.pattern.permute.xlu0 0
      %1258 = vperm.xlu0 %1257, %v1244
      %v1259 = vpop.permute.xlu0 %1258
      %1262 = vset.pattern.permute.xlu0 0
      %1263 = vperm.xlu0 %1262, %v1245
      %v1264 = vpop.permute.xlu0 %1263
      %v1266 = vmul.f32 %v1238, %v1249
      %v1267 = vmul.f32 %v1239, %v1254
      %v1268 = vmul.f32 %v1240, %v1259
      %v1269 = vmul.f32 %v1241, %v1264
      %v1270 = vld [vmem:[%s5] sm:$0xff]
      %v1271 = vld [vmem:[%s5 + $0x8] sm:$0xff]
      %v1272 = vld [vmem:[%s5 + $0x10] sm:$0xff]
      %v1273 = vld [vmem:[%s5 + $0x18] sm:$0xff]
      %1275 = vset.pattern.permute.xlu0 0
      %1276 = vperm.xlu0 %1275, %v1270
      %v1277 = vpop.permute.xlu0 %1276
      %1280 = vset.pattern.permute.xlu0 0
      %1281 = vperm.xlu0 %1280, %v1271
      %v1282 = vpop.permute.xlu0 %1281
      %1285 = vset.pattern.permute.xlu0 0
      %1286 = vperm.xlu0 %1285, %v1272
      %v1287 = vpop.permute.xlu0 %1286
      %1290 = vset.pattern.permute.xlu0 0
      %1291 = vperm.xlu0 %1290, %v1273
      %v1292 = vpop.permute.xlu0 %1291
      %v1294 = vadd.f32 %v1266, %v1277
      %v1295 = vadd.f32 %v1267, %v1282
      %v1296 = vadd.f32 %v1268, %v1287
      %v1297 = vadd.f32 %v1269, %v1292
      %v1298 = vmul.f32 %v1294, 0.5
      %v1299 = vmul.f32 %v1295, 0.5
      %v1300 = vmul.f32 %v1296, 0.5
      %v1301 = vmul.f32 %v1297, 0.5
      %v1302 = vmul.f32 %v1294, 0.70710677
      %v1303 = vmul.f32 %v1295, 0.70710677
      %v1304 = vmul.f32 %v1296, 0.70710677
      %v1305 = vmul.f32 %v1297, 0.70710677
      %v1306 = vand.u32 2147483647, %v1302
      %v1307 = vand.u32 2147483647, %v1303
      %v1308 = vand.u32 2147483647, %v1304
      %v1309 = vand.u32 2147483647, %v1305
      %v1310 = vmul.f32 %v1306, 0.3275911
      %v1311 = vmul.f32 %v1307, 0.3275911
      %v1312 = vmul.f32 %v1308, 0.3275911
      %v1313 = vmul.f32 %v1309, 0.3275911
      %v1314 = vadd.f32 %v1310, 1.0
      %v1315 = vadd.f32 %v1311, 1.0
      %v1316 = vadd.f32 %v1312, 1.0
      %v1317 = vadd.f32 %v1313, 1.0
      %v1318 = vrcp.pop %v1314
      %v1319 = vrcp.pop %v1315
      %v1320 = vrcp.pop %v1316
      %v1321 = vrcp.pop %v1317
      %v1322 = vmul.f32 %v1314, %v1318
      %v1323 = vmul.f32 %v1315, %v1319
      %v1324 = vmul.f32 %v1316, %v1320
      %v1325 = vmul.f32 %v1317, %v1321
      %v1326 = vsub.f32 2.0, %v1322
      %v1327 = vsub.f32 2.0, %v1323
      %v1328 = vsub.f32 2.0, %v1324
      %v1329 = vsub.f32 2.0, %v1325
      %v1330 = vmul.f32 %v1318, %v1326
      %v1331 = vmul.f32 %v1319, %v1327
      %v1332 = vmul.f32 %v1320, %v1328
      %v1333 = vmul.f32 %v1321, %v1329
      %v1334 = vmul.f32 %v1330, 1.0614054
      %v1335 = vmul.f32 %v1331, 1.0614054
      %v1336 = vmul.f32 %v1332, 1.0614054
      %v1337 = vmul.f32 %v1333, 1.0614054
      %v1338 = vadd.f32 %v1334, -1.4531521
      %v1339 = vadd.f32 %v1335, -1.4531521
      %v1340 = vadd.f32 %v1336, -1.4531521
      %v1341 = vadd.f32 %v1337, -1.4531521
      %v1342 = vmul.f32 %v1338, %v1330
      %v1343 = vmul.f32 %v1339, %v1331
      %v1344 = vmul.f32 %v1340, %v1332
      %v1345 = vmul.f32 %v1341, %v1333
      %v1346 = vadd.f32 %v1342, 1.4214138
      %v1347 = vadd.f32 %v1343, 1.4214138
      %v1348 = vadd.f32 %v1344, 1.4214138
      %v1349 = vadd.f32 %v1345, 1.4214138
      %v1350 = vmul.f32 %v1346, %v1330
      %v1351 = vmul.f32 %v1347, %v1331
      %v1352 = vmul.f32 %v1348, %v1332
      %v1353 = vmul.f32 %v1349, %v1333
      %v1354 = vadd.f32 %v1350, -0.28449672
      %v1355 = vadd.f32 %v1351, -0.28449672
      %v1356 = vadd.f32 %v1352, -0.28449672
      %v1357 = vadd.f32 %v1353, -0.28449672
      %v1358 = vmul.f32 %v1354, %v1330
      %v1359 = vmul.f32 %v1355, %v1331
      %v1360 = vmul.f32 %v1356, %v1332
      %v1361 = vmul.f32 %v1357, %v1333
      %v1362 = vadd.f32 %v1358, 0.2548296
      %v1363 = vadd.f32 %v1359, 0.2548296
      %v1364 = vadd.f32 %v1360, 0.2548296
      %v1365 = vadd.f32 %v1361, 0.2548296
      %v1366 = vmul.f32 %v1362, %v1330
      %v1367 = vmul.f32 %v1363, %v1331
      %v1368 = vmul.f32 %v1364, %v1332
      %v1369 = vmul.f32 %v1365, %v1333
      %v1370 = vsub.f32 0.0, %v1306
      %v1371 = vsub.f32 0.0, %v1307
      %v1372 = vsub.f32 0.0, %v1308
      %v1373 = vsub.f32 0.0, %v1309
      %v1374 = vmul.f32 %v1370, %v1306
      %v1375 = vmul.f32 %v1371, %v1307
      %v1376 = vmul.f32 %v1372, %v1308
      %v1377 = vmul.f32 %v1373, %v1309
      %v1378 = vmul.f32 %v1374, 1.442695
      %v1379 = vpow.pop %v1378
      %v1380 = vmul.f32 %v1375, 1.442695
      %v1381 = vpow.pop %v1380
      %v1382 = vmul.f32 %v1376, 1.442695
      %v1383 = vpow.pop %v1382
      %v1384 = vmul.f32 %v1377, 1.442695
      %v1385 = vpow.pop %v1384
      %v1386 = vmul.f32 %v1366, %v1379
      %v1387 = vmul.f32 %v1367, %v1381
      %v1388 = vmul.f32 %v1368, %v1383
      %v1389 = vmul.f32 %v1369, %v1385
      %v1390 = vsub.f32 1.0, %v1386
      %v1391 = vsub.f32 1.0, %v1387
      %v1392 = vsub.f32 1.0, %v1388
      %v1393 = vsub.f32 1.0, %v1389
      %vm1394 = vcmp.ge.f32.partialorder %v1302, 0.0
      %vm1395 = vcmp.ge.f32.partialorder %v1303, 0.0
      %vm1396 = vcmp.ge.f32.partialorder %v1304, 0.0
      %vm1397 = vcmp.ge.f32.partialorder %v1305, 0.0
      %v1398 = vsub.f32 0.0, %v1390
      %v1399 = vsub.f32 0.0, %v1391
      %v1400 = vsub.f32 0.0, %v1392
      %v1401 = vsub.f32 0.0, %v1393
      %v1402 = vsel %vm1394, %v1390, %v1398
      %v1403 = vsel %vm1395, %v1391, %v1399
      %v1404 = vsel %vm1396, %v1392, %v1400
      %v1405 = vsel %vm1397, %v1393, %v1401
      %v1406 = vadd.f32 %v1402, 1.0
      %v1407 = vadd.f32 %v1403, 1.0
      %v1408 = vadd.f32 %v1404, 1.0
      %v1409 = vadd.f32 %v1405, 1.0
      %v1410 = vmul.f32 %v1298, %v1406
      %v1411 = vmul.f32 %v1299, %v1407
      %v1412 = vmul.f32 %v1300, %v1408
      %v1413 = vmul.f32 %v1301, %v1409
      %v1414 = vld [vmem:[%s3] sm:$0xff]
      %v1415 = vld [vmem:[%s3 + $0x8] sm:$0xff]
      %v1416 = vld [vmem:[%s3 + $0x10] sm:$0xff]
      %v1417 = vld [vmem:[%s3 + $0x18] sm:$0xff]
      %v1418 = vld [vmem:[%s3 + $0x20] sm:$0xff]
      %v1419 = vld [vmem:[%s3 + $0x28] sm:$0xff]
      %v1420 = vld [vmem:[%s3 + $0x30] sm:$0xff]
      %v1421 = vld [vmem:[%s3 + $0x38] sm:$0xff]
      %v1422 = vld [vmem:[%s3 + $0x40] sm:$0xff]
      %vm1423 = vcmask 261120
      %v1425 = vsel %vm1423, %v1414, 0
      %v1428 = vsel %vm1423, %v1415, 0
      %v1431 = vsel %vm1423, %v1416, 0
      %v1434 = vsel %vm1423, %v1417, 0
      %v1437 = vsel %vm1423, %v1418, 0
      %v1440 = vsel %vm1423, %v1419, 0
      %v1443 = vsel %vm1423, %v1420, 0
      %v1446 = vsel %vm1423, %v1421, 0
      %v1449 = vsel %vm1423, %v1422, 0
      %1451 = vmatpush.msra.mxu0 0.0
      %1452 = vmatpush.msra.mxu0 0.0
      %1453 = vmatpush.msra.mxu0 0.0
      %1454 = vmatpush.msra.mxu0 0.0
      %1455 = vmatpush.msra.mxu0 0.0
      %1456 = vmatpush.msra.mxu0 0.0
      %1457 = vmatpush.msra.mxu0 0.0
      %1458 = vmatpush.msra.mxu0 0.0
      %1459 = vmatpush.msra.mxu0 0.0
      %1460 = vmatpush.msra.mxu0 0.0
      %1461 = vmatpush.msra.mxu0 0.0
      %1462 = vmatpush.msra.mxu0 0.0
      %1463 = vmatpush.msra.mxu0 %v1413
      %1464 = vmatpush.msra.mxu0 %v1412
      %1465 = vmatpush.msra.mxu0 %v1411
      %1466 = vmatpush.msra.mxu0 %v1410
      %1467 = vmatmul.f32.gmra.mxu0 %v1425
      %v1468 = vpop.f32.mrf.mxu0
      %v1469 = vadd.f32 0.0, %v1468
      %1470 = vmatmul.f32.gmra.mxu0 %v1428
      %v1471 = vpop.f32.mrf.mxu0
      %v1472 = vadd.f32 0.0, %v1471
      %1473 = vmatmul.f32.gmra.mxu0 %v1431
      %v1474 = vpop.f32.mrf.mxu0
      %v1475 = vadd.f32 0.0, %v1474
      %1476 = vmatmul.f32.gmra.mxu0 %v1434
      %v1477 = vpop.f32.mrf.mxu0
      %v1478 = vadd.f32 0.0, %v1477
      %1479 = vmatmul.f32.gmra.mxu0 %v1437
      %v1480 = vpop.f32.mrf.mxu0
      %v1481 = vadd.f32 0.0, %v1480
      %1482 = vmatmul.f32.gmra.mxu0 %v1440
      %v1483 = vpop.f32.mrf.mxu0
      %v1484 = vadd.f32 0.0, %v1483
      %1485 = vmatmul.f32.gmra.mxu0 %v1443
      %v1486 = vpop.f32.mrf.mxu0
      %v1487 = vadd.f32 0.0, %v1486
      %1488 = vmatmul.f32.gmra.mxu0 %v1446
      %v1489 = vpop.f32.mrf.mxu0
      %v1490 = vadd.f32 0.0, %v1489
      %1491 = vmatmul.f32.gmra.mxu0 %v1449
      %v1492 = vpop.f32.mrf.mxu0
      %v1493 = vadd.f32 0.0, %v1492
      %1494 = vdwg.mxu0
      %v1495 = vld [vmem:[%s6] sm:$0xff]
      %v1496 = vld [vmem:[%s6 + $0x8] sm:$0xff]
      %v1497 = vld [vmem:[%s6 + $0x10] sm:$0xff]
      %v1498 = vld [vmem:[%s6 + $0x18] sm:$0xff]
      %v1499 = vld [vmem:[%s6 + $0x20] sm:$0xff]
      %v1500 = vld [vmem:[%s6 + $0x28] sm:$0xff]
      %v1501 = vld [vmem:[%s6 + $0x30] sm:$0xff]
      %v1502 = vld [vmem:[%s6 + $0x38] sm:$0xff]
      %v1503 = vld [vmem:[%s6 + $0x40] sm:$0xff]
      %1505 = vset.pattern.permute.xlu0 0
      %1506 = vperm.xlu0 %1505, %v1495
      %v1507 = vpop.permute.xlu0 %1506
      %1510 = vset.pattern.permute.xlu0 0
      %1511 = vperm.xlu0 %1510, %v1496
      %v1512 = vpop.permute.xlu0 %1511
      %1515 = vset.pattern.permute.xlu0 0
      %1516 = vperm.xlu0 %1515, %v1497
      %v1517 = vpop.permute.xlu0 %1516
      %1520 = vset.pattern.permute.xlu0 0
      %1521 = vperm.xlu0 %1520, %v1498
      %v1522 = vpop.permute.xlu0 %1521
      %1525 = vset.pattern.permute.xlu0 0
      %1526 = vperm.xlu0 %1525, %v1499
      %v1527 = vpop.permute.xlu0 %1526
      %1530 = vset.pattern.permute.xlu0 0
      %1531 = vperm.xlu0 %1530, %v1500
      %v1532 = vpop.permute.xlu0 %1531
      %1535 = vset.pattern.permute.xlu0 0
      %1536 = vperm.xlu0 %1535, %v1501
      %v1537 = vpop.permute.xlu0 %1536
      %1540 = vset.pattern.permute.xlu0 0
      %1541 = vperm.xlu0 %1540, %v1502
      %v1542 = vpop.permute.xlu0 %1541
      %1545 = vset.pattern.permute.xlu0 0
      %1546 = vperm.xlu0 %1545, %v1503
      %v1547 = vpop.permute.xlu0 %1546
      %v1549 = vmul.f32 %v1469, %v1507
      %v1550 = vmul.f32 %v1472, %v1512
      %v1551 = vmul.f32 %v1475, %v1517
      %v1552 = vmul.f32 %v1478, %v1522
      %v1553 = vmul.f32 %v1481, %v1527
      %v1554 = vmul.f32 %v1484, %v1532
      %v1555 = vmul.f32 %v1487, %v1537
      %v1556 = vmul.f32 %v1490, %v1542
      %v1557 = vmul.f32 %v1493, %v1547
      %v1558 = vld [vmem:[%s7] sm:$0xff]
      %v1559 = vld [vmem:[%s7 + $0x8] sm:$0xff]
      %v1560 = vld [vmem:[%s7 + $0x10] sm:$0xff]
      %v1561 = vld [vmem:[%s7 + $0x18] sm:$0xff]
      %v1562 = vld [vmem:[%s7 + $0x20] sm:$0xff]
      %v1563 = vld [vmem:[%s7 + $0x28] sm:$0xff]
      %v1564 = vld [vmem:[%s7 + $0x30] sm:$0xff]
      %v1565 = vld [vmem:[%s7 + $0x38] sm:$0xff]
      %v1566 = vld [vmem:[%s7 + $0x40] sm:$0xff]
      %1568 = vset.pattern.permute.xlu0 0
      %1569 = vperm.xlu0 %1568, %v1558
      %v1570 = vpop.permute.xlu0 %1569
      %1573 = vset.pattern.permute.xlu0 0
      %1574 = vperm.xlu0 %1573, %v1559
      %v1575 = vpop.permute.xlu0 %1574
      %1578 = vset.pattern.permute.xlu0 0
      %1579 = vperm.xlu0 %1578, %v1560
      %v1580 = vpop.permute.xlu0 %1579
      %1583 = vset.pattern.permute.xlu0 0
      %1584 = vperm.xlu0 %1583, %v1561
      %v1585 = vpop.permute.xlu0 %1584
      %1588 = vset.pattern.permute.xlu0 0
      %1589 = vperm.xlu0 %1588, %v1562
      %v1590 = vpop.permute.xlu0 %1589
      %1593 = vset.pattern.permute.xlu0 0
      %1594 = vperm.xlu0 %1593, %v1563
      %v1595 = vpop.permute.xlu0 %1594
      %1598 = vset.pattern.permute.xlu0 0
      %1599 = vperm.xlu0 %1598, %v1564
      %v1600 = vpop.permute.xlu0 %1599
      %1603 = vset.pattern.permute.xlu0 0
      %1604 = vperm.xlu0 %1603, %v1565
      %v1605 = vpop.permute.xlu0 %1604
      %1608 = vset.pattern.permute.xlu0 0
      %1609 = vperm.xlu0 %1608, %v1566
      %v1610 = vpop.permute.xlu0 %1609
      %v1612 = vadd.f32 %v1549, %v1570
      %v1613 = vadd.f32 %v1550, %v1575
      %v1614 = vadd.f32 %v1551, %v1580
      %v1615 = vadd.f32 %v1552, %v1585
      %v1616 = vadd.f32 %v1553, %v1590
      %v1617 = vadd.f32 %v1554, %v1595
      %v1618 = vadd.f32 %v1555, %v1600
      %v1619 = vadd.f32 %v1556, %v1605
      %v1620 = vadd.f32 %v1557, %v1610
      %vm1621 = vcmask 130048
      %1622 = vst.msk [vmem:[%s370] sm:$0xff] %vm1621, %v1612
      %1623 = vst.msk [vmem:[%s370 + $0x8] sm:$0xff] %vm1621, %v1613
      %1624 = vst.msk [vmem:[%s370 + $0x10] sm:$0xff] %vm1621, %v1614
      %1625 = vst.msk [vmem:[%s370 + $0x18] sm:$0xff] %vm1621, %v1615
      %1626 = vst.msk [vmem:[%s370 + $0x20] sm:$0xff] %vm1621, %v1616
      %1627 = vst.msk [vmem:[%s370 + $0x28] sm:$0xff] %vm1621, %v1617
      %1628 = vst.msk [vmem:[%s370 + $0x30] sm:$0xff] %vm1621, %v1618
      %1629 = vst.msk [vmem:[%s370 + $0x38] sm:$0xff] %vm1621, %v1619
      %1630 = vst.msk [vmem:[%s370 + $0x40] sm:$0xff] %vm1621, %v1620
      %p1631 = scmp.lt.s32.totalorder %s23, 1
      %s1632 = scalar_select %p1631, %s23, 1
      %p1633 = scmp.lt.s32.totalorder %s24, 0
      %s1634 = scalar_select %p1633, %s24, 0
      %s1635 = smul.addr %s1632, 9
      %s1636 = sadd.s32 %s1634, %s1635
      %s1637 = smul.addr %s1636, 8
      %s1638 = scalar_lea.vmem %s8, %s1637
      // Predicated region
      $region53: #{tpu_custom_call.1} parent=51 // pred_check
        %p1639 = pneg %p233
      $region54: #{tpu_custom_call.1} parent=51 // pred_check_branch
        %1641 = sbr.rel (%p1639) target = $region56
      $region55: #{tpu_custom_call.1} parent=51 // pred_region
        _
      $region56: #{tpu_custom_call.1} parent=51 // pred_fallthru
        _
    $region52: #{tpu_custom_call.1} parent=5 // pred_fallthru
      _
    %p1642 = scmp.le.s32.totalorder 2, %s14
    // Predicated region
    $region57: #{tpu_custom_call.1} parent=5 // pred_check
      %p1643 = pneg %p1642
    $region58: #{tpu_custom_call.1} parent=5 // pred_check_branch
      %1645 = sbr.rel (%p1643) target = $region60
    $region59: #{tpu_custom_call.1} parent=5 // pred_region
      %s1646 = ssub.s32 %s14, 2
      // Predicated region
      $region61: #{tpu_custom_call.1} parent=59 // pred_check
        %p1647 = pneg %p239
      $region62: #{tpu_custom_call.1} parent=59 // pred_check_branch
        %1649 = sbr.rel (%p1647) target = $region64
      $region63: #{tpu_custom_call.1} parent=59 // pred_region
        %p1650 = scmp.lt.s32.totalorder %s25, 1
        %s1651 = scalar_select %p1650, %s25, 1
        %p1652 = scmp.lt.s32.totalorder %s26, 0
        %s1653 = scalar_select %p1652, %s26, 0
        %s1654 = smul.addr %s1651, 9
        %s1655 = sadd.s32 %s1653, %s1654
        %s1656 = smul.addr %s1655, 8
        %s1657 = scalar_lea.vmem %s8, %s1656
      $region64: #{tpu_custom_call.1} parent=59 // pred_fallthru
        _
    $region60: #{tpu_custom_call.1} parent=5 // pred_fallthru
      _
  $region6: #{tpu_custom_call.1} parent=0 // loop_footer
    %s18 = sadd.s32 1, %s14
  $region7: #{tpu_custom_call.1} parent=0 // loop_footer_branch
    %13 = sbr.rel target = $region3
  $region8: #{tpu_custom_call.1} parent=0 // loop_exit
    _

</llo_original>
